<compile_context>
chip_gen: v5e
topology: v5e:2x2
jax: 0.10.0
libtpu: 0.0.40
codegen_flags: <defaults>
</compile_context>

<pallas_src>
import math
import functools

import jax
import jax.numpy as jnp
from jax.experimental import pallas as pl
from jax.experimental.pallas import tpu as pltpu


def _mha_kernel(*refs, heads, d_k, d_model, has_mask, has_dropout, return_attn,
                concat_after, compute_dtype):
    refs = list(refs)
    idx = 0
    q_ref = refs[idx]; idx += 1
    k_ref = refs[idx]; idx += 1
    v_ref = refs[idx]; idx += 1
    mask_ref = None
    drop_ref = None
    if has_mask:
        mask_ref = refs[idx]; idx += 1
    if has_dropout:
        drop_ref = refs[idx]; idx += 1
    (wq_ref, bq_ref, wk_ref, bk_ref,
     wv_ref, bv_ref, wo_ref, bo_ref) = refs[idx:idx + 8]
    idx += 8
    out_ref = refs[idx]; idx += 1
    attn_ref = None
    if return_attn:
        attn_ref = refs[idx]; idx += 1
    kproj_ref = refs[idx]; idx += 1      # VMEM scratch: cached K projection (Lk, d_model)
    vproj_ref = refs[idx]; idx += 1      # VMEM scratch: cached V projection (Lk, d_model)

    cd = compute_dtype
    f32 = jnp.float32

    # ---- K/V projections: compute once per batch element (query-tile 0), cache in
    #      VMEM scratch, reuse for all subsequent query tiles of the same batch entry.
    @pl.when(pl.program_id(1) == 0)
    def _():
        k_in = k_ref[0]                  # (Lk, k_in_dim)
        v_in = v_ref[0]                  # (Lk, v_in_dim)
        kp = jnp.dot(k_in.astype(cd), wk_ref[...].astype(cd),
                     preferred_element_type=f32) + bk_ref[...]
        vp = jnp.dot(v_in.astype(cd), wv_ref[...].astype(cd),
                     preferred_element_type=f32) + bv_ref[...]
        kproj_ref[...] = kp.astype(cd)
        vproj_ref[...] = vp.astype(cd)

    # ---- Q projection for this query tile (MXU, f32 accumulation) ----
    q_in = q_ref[0]                      # (TQ, q_dim)
    q_proj = jnp.dot(q_in.astype(cd), wq_ref[...].astype(cd),
                     preferred_element_type=f32) + bq_ref[...]
    # fold 1/sqrt(d_k) into Q once (TQ*d_model mults instead of H*TQ*Lk)
    q_proj = q_proj * jnp.float32(1.0 / math.sqrt(d_k))

    tq = q_proj.shape[0]
    lk = kproj_ref.shape[0]

    # ---- head-batched attention: one MXU push per phase instead of H tiny matmuls ----
    q4 = q_proj.astype(cd).reshape(tq, heads, d_k)
    k4 = kproj_ref[...].reshape(lk, heads, d_k)
    v4 = vproj_ref[...].reshape(lk, heads, d_k)

    scores = jnp.einsum("qhd,khd->hqk", q4, k4,
                        preferred_element_type=f32)             # (H, TQ, Lk) f32

    if has_mask:
        mzero = mask_ref[0] == 0.0                              # hoisted, (TQ, Lk)
        scores = jnp.where(mzero[None, :, :], jnp.float32(-10000.0), scores)

    # softmax over keys (f32 elementwise; divide only the (H, TQ, 1) reduction)
    m = jnp.max(scores, axis=-1, keepdims=True)
    e = jnp.exp(scores - m)
    denom = jnp.sum(e, axis=-1, keepdims=True)
    probs = e * (1.0 / denom)

    if has_dropout:
        # host-generated inverted-dropout mask, values in {0, 1/keep_prob}
        probs = probs * drop_ref[0]

    if return_attn:
        # torch's attention() returns the post-dropout probabilities
        attn_ref[0] = probs.astype(attn_ref.dtype)

    ctx = jnp.einsum("hqk,khd->qhd", probs.astype(cd), v4,
                     preferred_element_type=f32)                # (TQ, H, d_k)
    concat = ctx.reshape(tq, d_model)                           # head concat via reshape

    if concat_after:
        concat = jnp.concatenate([q_in.astype(f32), concat], axis=-1)

    out = jnp.dot(concat.astype(cd), wo_ref[...].astype(cd),
                  preferred_element_type=f32) + bo_ref[...]
    out_ref[0] = out.astype(out_ref.dtype)


def init_mha_params(key, heads, q_dim, k_dim, v_dim, d_model, concat_after=False):
    """Deterministic synthetic parameters. Weights stored as (in_dim, d_model)."""
    ks = jax.random.split(key, 8)
    out_in = 2 * d_model if concat_after else d_model
    scale = 0.1
    params = dict(
        # NB: torch module declares k_linear with input dim v_dim (applied to k)
        #     and v_linear with input dim k_dim (applied to v); reproduced here.
        wq=scale * jax.random.normal(ks[0], (q_dim, d_model), jnp.float32),
        bq=scale * jax.random.normal(ks[1], (1, d_model), jnp.float32),
        wk=scale * jax.random.normal(ks[2], (v_dim, d_model), jnp.float32),
        bk=scale * jax.random.normal(ks[3], (1, d_model), jnp.float32),
        wv=scale * jax.random.normal(ks[4], (k_dim, d_model), jnp.float32),
        bv=scale * jax.random.normal(ks[5], (1, d_model), jnp.float32),
        wo=scale * jax.random.normal(ks[6], (out_in, d_model), jnp.float32),
        bo=scale * jax.random.normal(ks[7], (1, d_model), jnp.float32),
    )
    return params


def mha_pallas(params, q, k, v, mask=None, *, heads, d_model, dropout=0.1,
               concat_after=False, return_attn=True, seed=0, tq=None,
               compute_dtype=jnp.float32):
    B, Lq, q_in_dim = q.shape
    _, Lk, k_in_dim = k.shape
    _, Lv, v_in_dim = v.shape
    assert Lk == Lv, "k and v must share the key sequence length"
    d_k = d_model // heads
    assert heads * d_k == d_model
    assert params["wq"].shape[0] == q_in_dim
    assert params["wk"].shape[0] == k_in_dim
    assert params["wv"].shape[0] == v_in_dim
    out_in = 2 * d_model if concat_after else d_model
    assert params["wo"].shape == (out_in, d_model)
    if concat_after:
        assert q_in_dim == d_model, "concat_after requires q_dim == d_model"

    if tq is None:
        tq = min(Lq, 128)          # query tile; keeps VMEM working set bounded at large Lq
    assert Lq % tq == 0, "Lq must be divisible by the query tile"
    n_qt = Lq // tq

    has_mask = mask is not None
    has_dropout = float(dropout) > 0.0
    keep_prob = 1.0 - float(dropout)
    f32 = jnp.float32
    cd = compute_dtype

    # activations and weight matrices travel HBM->VMEM in compute_dtype (halves traffic
    # for bf16); biases / mask / dropout scale stay f32.
    args = [q.astype(cd), k.astype(cd), v.astype(cd)]
    in_specs = [
        pl.BlockSpec((1, tq, q_in_dim), lambda b, t: (b, t, 0)),
        pl.BlockSpec((1, Lk, k_in_dim), lambda b, t: (b, 0, 0)),
        pl.BlockSpec((1, Lk, v_in_dim), lambda b, t: (b, 0, 0)),
    ]
    if has_mask:
        args.append(mask.astype(f32))
        in_specs.append(pl.BlockSpec((1, tq, Lk), lambda b, t: (b, t, 0)))
    if has_dropout:
        # TODO(synk): in-kernel pltpu.prng_random_bits would avoid this extra HBM read,
        # but a host-generated inverted-dropout mask keeps F.dropout(training=True)
        # semantics portable (RNG stream necessarily differs from torch's generator).
        keep = jax.random.bernoulli(jax.random.PRNGKey(seed), p=keep_prob,
                                    shape=(B, heads, Lq, Lk))
        args.append(keep.astype(f32) * jnp.float32(1.0 / keep_prob))
        in_specs.append(pl.BlockSpec((1, heads, tq, Lk), lambda b, t: (b, 0, t, 0)))

    # grid-invariant weights/biases: constant block index, so the pipeline does not
    # re-fetch them across grid steps.
    for name, shape, dt in (("wq", (q_in_dim, d_model), cd), ("bq", (1, d_model), f32),
                            ("wk", (k_in_dim, d_model), cd), ("bk", (1, d_model), f32),
                            ("wv", (v_in_dim, d_model), cd), ("bv", (1, d_model), f32),
                            ("wo", (out_in, d_model), cd),   ("bo", (1, d_model), f32)):
        args.append(params[name].astype(dt))
        in_specs.append(pl.BlockSpec(shape, lambda b, t: (0, 0)))

    out_shape = [jax.ShapeDtypeStruct((B, Lq, d_model), f32)]
    out_specs = [pl.BlockSpec((1, tq, d_model), lambda b, t: (b, t, 0))]
    if return_attn:
        out_shape.append(jax.ShapeDtypeStruct((B, heads, Lq, Lk), f32))
        out_specs.append(pl.BlockSpec((1, heads, tq, Lk), lambda b, t: (b, 0, t, 0)))

    kernel = functools.partial(
        _mha_kernel, heads=heads, d_k=d_k, d_model=d_model,
        has_mask=has_mask, has_dropout=has_dropout, return_attn=return_attn,
        concat_after=concat_after, compute_dtype=cd)

    # advisory cost estimate so XLA can overlap the custom call with surrounding ops
    flops = 2 * B * (Lq * q_in_dim * d_model
                     + Lk * (k_in_dim + v_in_dim) * d_model
                     + 2 * heads * Lq * Lk * d_k
                     + Lq * out_in * d_model)
    bytes_accessed = 4 * (q.size + k.size + v.size
                          + B * Lq * d_model
                          + (B * heads * Lq * Lk if return_attn else 0)
                          + (B * Lq * Lk if has_mask else 0)
                          + (B * heads * Lq * Lk if has_dropout else 0)
                          + sum(params[n].size for n in
                                ("wq", "bq", "wk", "bk", "wv", "bv", "wo", "bo")))
    cost = pl.CostEstimate(flops=flops,
                           transcendentals=B * heads * Lq * Lk,
                           bytes_accessed=bytes_accessed)

    fn = pl.pallas_call(
        kernel,
        grid=(B, n_qt),
        in_specs=in_specs,
        out_specs=out_specs,
        out_shape=out_shape,
        scratch_shapes=[pltpu.VMEM((Lk, d_model), cd),    # cached K projection
                        pltpu.VMEM((Lk, d_model), cd)],   # cached V projection
        compiler_params=pltpu.CompilerParams(
            # batch axis parallel (megacore / v7x 2-TC sharding); query-tile axis
            # arbitrary because the K/V-projection scratch is filled at tile 0.
            dimension_semantics=("parallel", "arbitrary")),
        cost_estimate=cost,
    )
    res = fn(*args)
    if return_attn:
        return res[0], res[1]
    return res[0]


def mha_reference(params, q, k, v, heads, d_model, mask=None):
    """Pure-JAX reference (no dropout) mirroring the torch forward."""
    d_k = d_model // heads
    qp = q @ params["wq"] + params["bq"]
    kp = k @ params["wk"] + params["bk"]
    vp = v @ params["wv"] + params["bv"]
    B, Lq, _ = qp.shape
    Lk = kp.shape[1]
    qh = qp.reshape(B, Lq, heads, d_k).transpose(0, 2, 1, 3)
    kh = kp.reshape(B, Lk, heads, d_k).transpose(0, 2, 1, 3)
    vh = vp.reshape(B, Lk, heads, d_k).transpose(0, 2, 1, 3)
    s = jnp.einsum("bhqd,bhkd->bhqk", qh, kh) / math.sqrt(d_k)
    if mask is not None:
        s = jnp.where(mask[:, None, :, :] == 0, -10000.0, s)
    p = jax.nn.softmax(s, axis=-1)
    o = jnp.einsum("bhqk,bhkd->bhqd", p, vh)
    concat = o.transpose(0, 2, 1, 3).reshape(B, Lq, d_model)
    out = concat @ params["wo"] + params["bo"]
    return out, p


if __name__ == "__main__":
    # small config: heads=4, q_dim=k_dim=v_dim=16, d_model=32, seq=8, batch=2
    B, Lq, Lk = 2, 8, 8
    heads, d_model = 4, 32
    q_dim = k_dim = v_dim = 16

    root = jax.random.PRNGKey(0)
    kp, kq, kk, kv = jax.random.split(root, 4)
    params = init_mha_params(kp, heads, q_dim, k_dim, v_dim, d_model, concat_after=False)
    q = jax.random.normal(kq, (B, Lq, q_dim), jnp.float32)
    k = jax.random.normal(kk, (B, Lk, v_dim), jnp.float32)  # k_linear declared with v_dim (as in torch)
    v = jax.random.normal(kv, (B, Lk, k_dim), jnp.float32)  # v_linear declared with k_dim (as in torch)

    # 1) mask=None, dropout off: exact check vs pure-JAX reference (specialized no-mask kernel)
    out0, attn0 = mha_pallas(params, q, k, v, mask=None, heads=heads,
                             d_model=d_model, dropout=0.0)
    ref_out, ref_attn = mha_reference(params, q, k, v, heads, d_model)
    assert jnp.allclose(out0, ref_out, atol=1e-4, rtol=1e-4), "output mismatch (no mask)"
    assert jnp.allclose(attn0, ref_attn, atol=1e-5, rtol=1e-5), "attn mismatch (no mask)"

    # 2) explicit padding mask, dropout off
    mask = jnp.ones((B, Lq, Lk), jnp.float32).at[1, :, Lk - 2:].set(0.0)
    out_m, attn_m = mha_pallas(params, q, k, v, mask=mask, heads=heads,
                               d_model=d_model, dropout=0.0)
    ref_out_m, ref_attn_m = mha_reference(params, q, k, v, heads, d_model, mask=mask)
    assert jnp.allclose(out_m, ref_out_m, atol=1e-4, rtol=1e-4), "output mismatch (mask)"
    assert jnp.allclose(attn_m, ref_attn_m, atol=1e-5, rtol=1e-5), "attn mismatch (mask)"

    # 3) multi-query-tile path: Lq=16 with tq=8 exercises the cached-K/V scratch across tiles
    Lq2 = 16
    q2 = jax.random.normal(jax.random.split(root, 5)[4], (B, Lq2, q_dim), jnp.float32)
    mask2 = jnp.ones((B, Lq2, Lk), jnp.float32).at[0, :, Lk - 3:].set(0.0)
    out_t, attn_t = mha_pallas(params, q2, k, v, mask=mask2, heads=heads,
                               d_model=d_model, dropout=0.0, tq=8)
    ref_out_t, ref_attn_t = mha_reference(params, q2, k, v, heads, d_model, mask=mask2)
    assert jnp.allclose(out_t, ref_out_t, atol=1e-4, rtol=1e-4), "output mismatch (tiled)"
    assert jnp.allclose(attn_t, ref_attn_t, atol=1e-5, rtol=1e-5), "attn mismatch (tiled)"

    # 4) bf16 matmul inputs (f32 accumulate + f32 softmax): loose check vs f32 reference
    out_bf, _ = mha_pallas(params, q, k, v, mask=None, heads=heads, d_model=d_model,
                           dropout=0.0, compute_dtype=jnp.bfloat16)
    assert jnp.allclose(out_bf, ref_out, atol=5e-2, rtol=5e-2), "bf16 output mismatch"

    # 5) output-only variant (skips the attn HBM writeback entirely)
    out_only = mha_pallas(params, q, k, v, mask=None, heads=heads, d_model=d_model,
                          dropout=0.0, return_attn=False)
    assert jnp.allclose(out_only, ref_out, atol=1e-4, rtol=1e-4), "output-only mismatch"

    # 6) full module configuration: dropout=0.1 (F.dropout defaults to training=True)
    out, attn = mha_pallas(params, q, k, v, mask=None, heads=heads,
                           d_model=d_model, dropout=0.1, seed=1234)
    jax.block_until_ready((out, attn))
    print("KERNEL_OK")
</pallas_src>

<mosaic_0001>
module attributes {stable_mosaic.version = 11 : i64} {
  func.func @_mha_kernel(%arg0: i32, %arg1: i32, %arg2: memref<1x8x16xf32, #tpu.memory_space<vmem>>, %arg3: memref<1x8x16xf32, #tpu.memory_space<vmem>>, %arg4: memref<1x8x16xf32, #tpu.memory_space<vmem>>, %arg5: memref<16x32xf32, #tpu.memory_space<vmem>>, %arg6: memref<1x32xf32, #tpu.memory_space<vmem>>, %arg7: memref<16x32xf32, #tpu.memory_space<vmem>>, %arg8: memref<1x32xf32, #tpu.memory_space<vmem>>, %arg9: memref<16x32xf32, #tpu.memory_space<vmem>>, %arg10: memref<1x32xf32, #tpu.memory_space<vmem>>, %arg11: memref<32x32xf32, #tpu.memory_space<vmem>>, %arg12: memref<1x32xf32, #tpu.memory_space<vmem>>, %arg13: memref<1x8x32xf32, #tpu.memory_space<vmem>>, %arg14: memref<1x4x8x8xf32, #tpu.memory_space<vmem>>, %arg15: memref<8x32xf32, #tpu.memory_space<vmem>>, %arg16: memref<8x32xf32, #tpu.memory_space<vmem>>) attributes {dimension_semantics = [#tpu.dimension_semantics<parallel>, #tpu.dimension_semantics<arbitrary>], iteration_bounds = array<i64: 2, 1>, scalar_prefetch = 0 : i64, scratch_operands = 2 : i64, tpu.core_type = #tpu.core_type<tc>, window_params = [{transform_indices = @transform_0, window_bounds = array<i64: 1, 8, 16>}, {transform_indices = @transform_1, window_bounds = array<i64: 1, 8, 16>}, {transform_indices = @transform_2, window_bounds = array<i64: 1, 8, 16>}, {pipeline_mode = #tpu.pipeline_mode<synchronous>, transform_indices = @transform_3, window_bounds = array<i64: 16, 32>}, {pipeline_mode = #tpu.pipeline_mode<synchronous>, transform_indices = @transform_4, window_bounds = array<i64: 1, 32>}, {pipeline_mode = #tpu.pipeline_mode<synchronous>, transform_indices = @transform_5, window_bounds = array<i64: 16, 32>}, {pipeline_mode = #tpu.pipeline_mode<synchronous>, transform_indices = @transform_6, window_bounds = array<i64: 1, 32>}, {pipeline_mode = #tpu.pipeline_mode<synchronous>, transform_indices = @transform_7, window_bounds = array<i64: 16, 32>}, {pipeline_mode = #tpu.pipeline_mode<synchronous>, transform_indices = @transform_8, window_bounds = array<i64: 1, 32>}, {pipeline_mode = #tpu.pipeline_mode<synchronous>, transform_indices = @transform_9, window_bounds = array<i64: 32, 32>}, {pipeline_mode = #tpu.pipeline_mode<synchronous>, transform_indices = @transform_10, window_bounds = array<i64: 1, 32>}, {transform_indices = @transform_11, window_bounds = array<i64: 1, 8, 32>}, {transform_indices = @transform_12, window_bounds = array<i64: 1, 4, 8, 8>}]} {
    %c0_i32 = arith.constant 0 : i32
    %0 = arith.cmpi eq, %arg1, %c0_i32 : i32
    %1 = arith.extui %0 : i1 to i32
    %c0_i32_0 = arith.constant 0 : i32
    %2 = arith.cmpi ne, %1, %c0_i32_0 : i32
    scf.if %2 {
      %c0_29 = arith.constant 0 : index
      %c0_30 = arith.constant 0 : index
      %c0_31 = arith.constant 0 : index
      %43 = vector.load %arg3[%c0_29, %c0_30, %c0_31] : memref<1x8x16xf32, #tpu.memory_space<vmem>>, vector<1x8x16xf32>
      %44 = vector.shape_cast %43 : vector<1x8x16xf32> to vector<8x16xf32>
      %c0_32 = arith.constant 0 : index
      %c0_33 = arith.constant 0 : index
      %c0_34 = arith.constant 0 : index
      %45 = vector.load %arg4[%c0_32, %c0_33, %c0_34] : memref<1x8x16xf32, #tpu.memory_space<vmem>>, vector<1x8x16xf32>
      %46 = vector.shape_cast %45 : vector<1x8x16xf32> to vector<8x16xf32>
      %c0_35 = arith.constant 0 : index
      %c0_36 = arith.constant 0 : index
      %47 = vector.load %arg7[%c0_35, %c0_36] : memref<16x32xf32, #tpu.memory_space<vmem>>, vector<16x32xf32>
      %cst_37 = arith.constant dense<0.000000e+00> : vector<8x32xf32>
      %48 = tpu.matmul %44, %47, %cst_37 {dimension_numbers = #tpu.dot_dimension_numbers<[1], [0], [0], [1], [0, 0, 1, 1], [], []>} : vector<8x16xf32>, vector<16x32xf32>, vector<8x32xf32> -> vector<8x32xf32>
      %c0_38 = arith.constant 0 : index
      %c0_39 = arith.constant 0 : index
      %49 = vector.load %arg8[%c0_38, %c0_39] : memref<1x32xf32, #tpu.memory_space<vmem>>, vector<1x32xf32>
      %50 = vector.broadcast %49 : vector<1x32xf32> to vector<8x32xf32>
      %51 = arith.addf %48, %50 : vector<8x32xf32>
      %c0_40 = arith.constant 0 : index
      %c0_41 = arith.constant 0 : index
      %52 = vector.load %arg9[%c0_40, %c0_41] : memref<16x32xf32, #tpu.memory_space<vmem>>, vector<16x32xf32>
      %cst_42 = arith.constant dense<0.000000e+00> : vector<8x32xf32>
      %53 = tpu.matmul %46, %52, %cst_42 {dimension_numbers = #tpu.dot_dimension_numbers<[1], [0], [0], [1], [0, 0, 1, 1], [], []>} : vector<8x16xf32>, vector<16x32xf32>, vector<8x32xf32> -> vector<8x32xf32>
      %c0_43 = arith.constant 0 : index
      %c0_44 = arith.constant 0 : index
      %54 = vector.load %arg10[%c0_43, %c0_44] : memref<1x32xf32, #tpu.memory_space<vmem>>, vector<1x32xf32>
      %55 = vector.broadcast %54 : vector<1x32xf32> to vector<8x32xf32>
      %56 = arith.addf %53, %55 : vector<8x32xf32>
      %c0_45 = arith.constant 0 : index
      %c0_46 = arith.constant 0 : index
      %57 = vector.load %arg15[%c0_45, %c0_46] : memref<8x32xf32, #tpu.memory_space<vmem>>, vector<8x32xf32>
      tpu.vector_store %arg15[%c0_45, %c0_46], %51 {strides = array<i32>} : memref<8x32xf32, #tpu.memory_space<vmem>>, vector<8x32xf32>,
      %c0_47 = arith.constant 0 : index
      %c0_48 = arith.constant 0 : index
      %58 = vector.load %arg16[%c0_47, %c0_48] : memref<8x32xf32, #tpu.memory_space<vmem>>, vector<8x32xf32>
      tpu.vector_store %arg16[%c0_47, %c0_48], %56 {strides = array<i32>} : memref<8x32xf32, #tpu.memory_space<vmem>>, vector<8x32xf32>,
    } else {
    }
    %c0 = arith.constant 0 : index
    %c0_1 = arith.constant 0 : index
    %c0_2 = arith.constant 0 : index
    %3 = vector.load %arg2[%c0, %c0_1, %c0_2] : memref<1x8x16xf32, #tpu.memory_space<vmem>>, vector<1x8x16xf32>
    %4 = vector.shape_cast %3 : vector<1x8x16xf32> to vector<8x16xf32>
    %c0_3 = arith.constant 0 : index
    %c0_4 = arith.constant 0 : index
    %5 = vector.load %arg5[%c0_3, %c0_4] : memref<16x32xf32, #tpu.memory_space<vmem>>, vector<16x32xf32>
    %cst = arith.constant dense<0.000000e+00> : vector<8x32xf32>
    %6 = tpu.matmul %4, %5, %cst {dimension_numbers = #tpu.dot_dimension_numbers<[1], [0], [0], [1], [0, 0, 1, 1], [], []>} : vector<8x16xf32>, vector<16x32xf32>, vector<8x32xf32> -> vector<8x32xf32>
    %c0_5 = arith.constant 0 : index
    %c0_6 = arith.constant 0 : index
    %7 = vector.load %arg6[%c0_5, %c0_6] : memref<1x32xf32, #tpu.memory_space<vmem>>, vector<1x32xf32>
    %8 = vector.broadcast %7 : vector<1x32xf32> to vector<8x32xf32>
    %9 = arith.addf %6, %8 : vector<8x32xf32>
    %cst_7 = arith.constant 0.353553385 : f32
    %10 = vector.broadcast %cst_7 : f32 to vector<8x32xf32>
    %11 = arith.mulf %9, %10 : vector<8x32xf32>
    %12 = vector.shape_cast %11 : vector<8x32xf32> to vector<8x4x8xf32>
    %c0_8 = arith.constant 0 : index
    %c0_9 = arith.constant 0 : index
    %13 = vector.load %arg15[%c0_8, %c0_9] : memref<8x32xf32, #tpu.memory_space<vmem>>, vector<8x32xf32>
    %14 = vector.shape_cast %13 : vector<8x32xf32> to vector<8x4x8xf32>
    %c0_10 = arith.constant 0 : index
    %c0_11 = arith.constant 0 : index
    %15 = vector.load %arg16[%c0_10, %c0_11] : memref<8x32xf32, #tpu.memory_space<vmem>>, vector<8x32xf32>
    %16 = vector.shape_cast %15 : vector<8x32xf32> to vector<8x4x8xf32>
    "tpu.trace_start"() <{level = 10 : i32, message = "qhd,khd->hqk"}> : () -> ()
    %cst_12 = arith.constant dense<0.000000e+00> : vector<4x8x8xf32>
    %17 = tpu.matmul %12, %14, %cst_12 {dimension_numbers = #tpu.dot_dimension_numbers<[2], [2], [0], [0], [0, 1, 0, 0, 1, 0], [1], [1]>} : vector<8x4x8xf32>, vector<8x4x8xf32>, vector<4x8x8xf32> -> vector<4x8x8xf32>
    "tpu.trace_stop"() : () -> ()
    %cst_13 = arith.constant dense<0xFF800000> : vector<4x8xf32>
    %18 = vector.multi_reduction <maximumf>, %17, %cst_13 [2] : vector<4x8x8xf32> to vector<4x8xf32>
    %19 = vector.shape_cast %18 : vector<4x8xf32> to vector<4x8x1xf32>
    %20 = vector.broadcast %19 : vector<4x8x1xf32> to vector<4x8x8xf32>
    %21 = arith.subf %17, %20 : vector<4x8x8xf32>
    %22 = math.exp %21 : vector<4x8x8xf32>
    %cst_14 = arith.constant dense<0.000000e+00> : vector<4x8xf32>
    %23 = vector.multi_reduction <add>, %22, %cst_14 [2] : vector<4x8x8xf32> to vector<4x8xf32>
    %24 = vector.shape_cast %23 : vector<4x8xf32> to vector<4x8x1xf32>
    %cst_15 = arith.constant 1.000000e+00 : f32
    %25 = vector.broadcast %cst_15 : f32 to vector<4x8x1xf32>
    %26 = arith.divf %25, %24 : vector<4x8x1xf32>
    %27 = vector.broadcast %26 : vector<4x8x1xf32> to vector<4x8x8xf32>
    %28 = arith.mulf %22, %27 : vector<4x8x8xf32>
    %c0_16 = arith.constant 0 : index
    %c0_17 = arith.constant 0 : index
    %c0_18 = arith.constant 0 : index
    %c0_19 = arith.constant 0 : index
    %29 = vector.load %arg14[%c0_16, %c0_17, %c0_18, %c0_19] : memref<1x4x8x8xf32, #tpu.memory_space<vmem>>, vector<1x4x8x8xf32>
    %30 = vector.shape_cast %29 : vector<1x4x8x8xf32> to vector<4x8x8xf32>
    %31 = vector.shape_cast %28 : vector<4x8x8xf32> to vector<1x4x8x8xf32>
    tpu.vector_store %arg14[%c0_16, %c0_17, %c0_18, %c0_19], %31 {strides = array<i32>} : memref<1x4x8x8xf32, #tpu.memory_space<vmem>>, vector<1x4x8x8xf32>,
    "tpu.trace_start"() <{level = 10 : i32, message = "hqk,khd->qhd"}> : () -> ()
    %cst_20 = arith.constant dense<0.000000e+00> : vector<4x8x8xf32>
    %32 = tpu.matmul %16, %28, %cst_20 {dimension_numbers = #tpu.dot_dimension_numbers<[0], [2], [2], [1], [0, 1, 0, 2, 1, 1], [1], [0]>} : vector<8x4x8xf32>, vector<4x8x8xf32>, vector<4x8x8xf32> -> vector<4x8x8xf32>
    %33 = tpu.transpose %32, [2, 0, 1] : vector<4x8x8xf32> -> vector<8x4x8xf32>
    "tpu.trace_stop"() : () -> ()
    %34 = vector.shape_cast %33 : vector<8x4x8xf32> to vector<8x32xf32>
    %c0_21 = arith.constant 0 : index
    %c0_22 = arith.constant 0 : index
    %35 = vector.load %arg11[%c0_21, %c0_22] : memref<32x32xf32, #tpu.memory_space<vmem>>, vector<32x32xf32>
    %cst_23 = arith.constant dense<0.000000e+00> : vector<8x32xf32>
    %36 = tpu.matmul %34, %35, %cst_23 {dimension_numbers = #tpu.dot_dimension_numbers<[1], [0], [0], [1], [0, 0, 1, 1], [], []>} : vector<8x32xf32>, vector<32x32xf32>, vector<8x32xf32> -> vector<8x32xf32>
    %c0_24 = arith.constant 0 : index
    %c0_25 = arith.constant 0 : index
    %37 = vector.load %arg12[%c0_24, %c0_25] : memref<1x32xf32, #tpu.memory_space<vmem>>, vector<1x32xf32>
    %38 = vector.broadcast %37 : vector<1x32xf32> to vector<8x32xf32>
    %39 = arith.addf %36, %38 : vector<8x32xf32>
    %c0_26 = arith.constant 0 : index
    %c0_27 = arith.constant 0 : index
    %c0_28 = arith.constant 0 : index
    %40 = vector.load %arg13[%c0_26, %c0_27, %c0_28] : memref<1x8x32xf32, #tpu.memory_space<vmem>>, vector<1x8x32xf32>
    %41 = vector.shape_cast %40 : vector<1x8x32xf32> to vector<8x32xf32>
    %42 = vector.shape_cast %39 : vector<8x32xf32> to vector<1x8x32xf32>
    tpu.vector_store %arg13[%c0_26, %c0_27, %c0_28], %42 {strides = array<i32>} : memref<1x8x32xf32, #tpu.memory_space<vmem>>, vector<1x8x32xf32>,
    return
  }
  func.func @transform_0(%arg0: i32, %arg1: i32) -> (i32, i32, i32) {
    %c0_i32 = arith.constant 0 : i32
    %c0_i32_0 = arith.constant 0 : i32
    return %arg0, %arg1, %c0_i32 : i32, i32, i32
  }
  func.func @transform_1(%arg0: i32, %arg1: i32) -> (i32, i32, i32) {
    %c0_i32 = arith.constant 0 : i32
    %c0_i32_0 = arith.constant 0 : i32
    %c0_i32_1 = arith.constant 0 : i32
    return %arg0, %c0_i32, %c0_i32_0 : i32, i32, i32
  }
  func.func @transform_2(%arg0: i32, %arg1: i32) -> (i32, i32, i32) {
    %c0_i32 = arith.constant 0 : i32
    %c0_i32_0 = arith.constant 0 : i32
    %c0_i32_1 = arith.constant 0 : i32
    return %arg0, %c0_i32, %c0_i32_0 : i32, i32, i32
  }
  func.func @transform_3(%arg0: i32, %arg1: i32) -> (i32, i32) {
    %c0_i32 = arith.constant 0 : i32
    %c0_i32_0 = arith.constant 0 : i32
    %c0_i32_1 = arith.constant 0 : i32
    return %c0_i32, %c0_i32_0 : i32, i32
  }
  func.func @transform_4(%arg0: i32, %arg1: i32) -> (i32, i32) {
    %c0_i32 = arith.constant 0 : i32
    %c0_i32_0 = arith.constant 0 : i32
    %c0_i32_1 = arith.constant 0 : i32
    return %c0_i32, %c0_i32_0 : i32, i32
  }
  func.func @transform_5(%arg0: i32, %arg1: i32) -> (i32, i32) {
    %c0_i32 = arith.constant 0 : i32
    %c0_i32_0 = arith.constant 0 : i32
    %c0_i32_1 = arith.constant 0 : i32
    return %c0_i32, %c0_i32_0 : i32, i32
  }
  func.func @transform_6(%arg0: i32, %arg1: i32) -> (i32, i32) {
    %c0_i32 = arith.constant 0 : i32
    %c0_i32_0 = arith.constant 0 : i32
    %c0_i32_1 = arith.constant 0 : i32
    return %c0_i32, %c0_i32_0 : i32, i32
  }
  func.func @transform_7(%arg0: i32, %arg1: i32) -> (i32, i32) {
    %c0_i32 = arith.constant 0 : i32
    %c0_i32_0 = arith.constant 0 : i32
    %c0_i32_1 = arith.constant 0 : i32
    return %c0_i32, %c0_i32_0 : i32, i32
  }
  func.func @transform_8(%arg0: i32, %arg1: i32) -> (i32, i32) {
    %c0_i32 = arith.constant 0 : i32
    %c0_i32_0 = arith.constant 0 : i32
    %c0_i32_1 = arith.constant 0 : i32
    return %c0_i32, %c0_i32_0 : i32, i32
  }
  func.func @transform_9(%arg0: i32, %arg1: i32) -> (i32, i32) {
    %c0_i32 = arith.constant 0 : i32
    %c0_i32_0 = arith.constant 0 : i32
    %c0_i32_1 = arith.constant 0 : i32
    return %c0_i32, %c0_i32_0 : i32, i32
  }
  func.func @transform_10(%arg0: i32, %arg1: i32) -> (i32, i32) {
    %c0_i32 = arith.constant 0 : i32
    %c0_i32_0 = arith.constant 0 : i32
    %c0_i32_1 = arith.constant 0 : i32
    return %c0_i32, %c0_i32_0 : i32, i32
  }
  func.func @transform_11(%arg0: i32, %arg1: i32) -> (i32, i32, i32) {
    %c0_i32 = arith.constant 0 : i32
    %c0_i32_0 = arith.constant 0 : i32
    return %arg0, %arg1, %c0_i32 : i32, i32, i32
  }
  func.func @transform_12(%arg0: i32, %arg1: i32) -> (i32, i32, i32, i32) {
    %c0_i32 = arith.constant 0 : i32
    %c0_i32_0 = arith.constant 0 : i32
    %c0_i32_1 = arith.constant 0 : i32
    return %arg0, %c0_i32, %arg1, %c0_i32_0 : i32, i32, i32, i32
  }
}

</mosaic_0001>

<llo_original>
// kernel: tpu_custom_call.1
$region0: #{tpu_custom_call.1}
  #allocation0 [shape = 'u32[]', space=smem, size = 0x4, offset = 0x4, fixed_abs, tag = 'smem constant byte address 0x4 - core index']
  #allocation1 [shape = 'u32[72,128]{1,0:T(1,128)}', space=vmem, size = 0x9000, scoped, tag = 'internal scratch']
  #allocation2 [shape = 'f32[8,32]{1,0:T(8,128)}', space=vmem, size = 0x1000, scoped, tag = 'scratch operand']
  #allocation3 [shape = 'f32[8,32]{1,0:T(8,128)}', space=vmem, size = 0x1000, scoped, tag = 'scratch operand']
  %s0 = inlined_call_operand.hbm [shape: f32[2,8,16], index: 0, kind: input, shape index: {}]
  %s1 = inlined_call_operand.hbm [shape: f32[2,8,16], index: 1, kind: input, shape index: {}]
  %s2 = inlined_call_operand.hbm [shape: f32[2,8,16], index: 2, kind: input, shape index: {}]
  %s3 = inlined_call_operand.hbm [shape: f32[16,32], index: 3, kind: input, shape index: {}]
  %s4 = inlined_call_operand.vmem [shape: f32[1,32], index: 4, kind: input, shape index: {}]
  %s5 = inlined_call_operand.hbm [shape: f32[16,32], index: 5, kind: input, shape index: {}]
  %s6 = inlined_call_operand.vmem [shape: f32[1,32], index: 6, kind: input, shape index: {}]
  %s7 = inlined_call_operand.hbm [shape: f32[16,32], index: 7, kind: input, shape index: {}]
  %s8 = inlined_call_operand.vmem [shape: f32[1,32], index: 8, kind: input, shape index: {}]
  %s9 = inlined_call_operand.hbm [shape: f32[32,32], index: 9, kind: input, shape index: {}]
  %s10 = inlined_call_operand.vmem [shape: f32[1,32], index: 10, kind: input, shape index: {}]
  %s11 = inlined_call_operand.hbm [shape: f32[2,8,32], index: 11, kind: output, shape index: {0}]
  %s12 = inlined_call_operand.hbm [shape: f32[2,4,8,8], index: 12, kind: output, shape index: {1}]
  %13 = xla_tuple %s11, %s12
  %s14 = sld [smem:[#allocation0]]
  $region117: #{tpu_custom_call.1} parent=0
    _
  %s16 = ssub.s32 1, %s14
  %s17 = scalar_select 0, %s16, %s14
  $region1: #{tpu_custom_call.1} parent=0
    #allocation4 [shape = 'u8[8192]{0}', space=vmem, size = 0x2000, scoped, tag = 'input window, operand 0']
    #allocation5 [shape = 's32[2]{0}', space=sflag, size = 0x8, scoped, tag = 'scoped memory for tpu_custom_call.1']
    #allocation6 [shape = 's32[2]{0}', space=sflag, size = 0x8, scoped, tag = 'scoped memory for tpu_custom_call.1']
    #allocation7 [shape = 'u8[8192]{0}', space=vmem, size = 0x2000, scoped, tag = 'input window, operand 1']
    #allocation8 [shape = 's32[2]{0}', space=sflag, size = 0x8, scoped, tag = 'scoped memory for tpu_custom_call.1']
    #allocation9 [shape = 'u8[8192]{0}', space=vmem, size = 0x2000, scoped, tag = 'input window, operand 2']
    #allocation10 [shape = 'u8[8192]{0}', space=vmem, size = 0x2000, scoped, tag = 'input window, operand 3, single buffered']
    #allocation11 [shape = 's32[1]{0}', space=sflag, size = 0x4, scoped, tag = 'scoped memory for tpu_custom_call.1']
    #allocation12 [shape = 'u8[8192]{0}', space=vmem, size = 0x2000, scoped, tag = 'input window, operand 5, single buffered']
    #allocation13 [shape = 'u8[8192]{0}', space=vmem, size = 0x2000, scoped, tag = 'input window, operand 7, single buffered']
    #allocation14 [shape = 's32[1]{0}', space=sflag, size = 0x4, scoped, tag = 'scoped memory for tpu_custom_call.1']
    #allocation15 [shape = 'u8[16384]{0}', space=vmem, size = 0x4000, scoped, tag = 'input window, operand 9, single buffered']
    #allocation16 [shape = 'u8[8192]{0}', space=vmem, size = 0x2000, scoped, tag = 'output window, operand 0']
    #allocation17 [shape = 'u8[32768]{0}', space=vmem, size = 0x8000, scoped, tag = 'output window, operand 1']
    #allocation18 [shape = 's32[2]{0}', space=sflag, size = 0x8, scoped, tag = 'scoped memory for tpu_custom_call.1']
    %18 = vsyncpa [#allocation5], 0
    %s19 = scalar_lea.sflag [#allocation5], 1
    %20 = vsyncpa %s19, 0
    %21 = vsyncpa [#allocation8], 0
    %s22 = scalar_lea.sflag [#allocation8], 1
    %23 = vsyncpa %s22, 0
    %24 = vsyncpa [#allocation11], 0
    %25 = vsyncpa [#allocation14], 0
    %26 = vsyncpa [#allocation6], 0
    %s27 = scalar_lea.sflag [#allocation6], 1
    %28 = vsyncpa %s27, 0
    %29 = vsyncpa [#allocation18], 0
    %s30 = scalar_lea.sflag [#allocation18], 1
    %31 = vsyncpa %s30, 0
    loop: start=0, step=1, limit=4
    $region2: #{tpu_custom_call.1} parent=1 // loop_pre_header
      _
    $region3: #{tpu_custom_call.1} parent=1 // loop_header
      %s33 = sphi 0, %s37
      %p34 = scmp.ge.s32.totalorder %s33, 4
      %s40 = sphi 0, %s52
      %s41 = sphi 0, %s48
      %s42 = sphi 0, %s40
      %s43 = sphi 0, %s41
      %s44 = sphi 0, %s42
      %s45 = sphi 0, %s43
      %s57 = sphi 0, %s59
      %s60 = sphi 0, %s57
      %s61 = sphi 0, %s60
      %s77 = sphi 0, %s61
      %s83 = sphi 0, %s85
      %s86 = sphi 0, %s83
      %s87 = sphi 0, %s86
      %s103 = sphi 0, %s87
      %s109 = sphi 0, %s111
      %s112 = sphi 0, %s109
      %s113 = sphi 0, %s112
      %s129 = sphi 0, %s113
      %s133 = sphi 0, %s133
      %s135 = sphi 0, %s133
      %s136 = sphi 0, %s135
      %s150 = sphi 0, %s136
      %s154 = sphi 0, %s154
      %s156 = sphi 0, %s154
      %s157 = sphi 0, %s156
      %s171 = sphi 0, %s157
      %s175 = sphi 0, %s175
      %s177 = sphi 0, %s175
      %s178 = sphi 0, %s177
      %s192 = sphi 0, %s178
      %s196 = sphi 0, %s196
      %s198 = sphi 0, %s196
      %s199 = sphi 0, %s198
      %s213 = sphi 0, %s199
      %s217 = sphi 0, %s217
      %s219 = sphi 0, %s217
      %s220 = sphi 0, %s219
      %s234 = sphi 0, %s220
      %s238 = sphi 0, %s238
      %s240 = sphi 0, %s238
      %s241 = sphi 0, %s240
      %s255 = sphi 0, %s241
      %s259 = sphi 0, %s259
      %s261 = sphi 0, %s259
      %s262 = sphi 0, %s261
      %s276 = sphi 0, %s262
      %s280 = sphi 0, %s280
      %s282 = sphi 0, %s280
      %s283 = sphi 0, %s282
      %s297 = sphi 0, %s283
      %s305 = sphi 0, %s307
      %s308 = sphi 0, %s305
      %s309 = sphi 0, %s308
      %s325 = sphi 0, %s309
      %s333 = sphi 0, %s335
      %s336 = sphi 0, %s333
      %s337 = sphi 0, %s336
      %s353 = sphi 0, %s337
    $region4: #{tpu_custom_call.1} parent=1 // loop_header_branch
      %36 = sbr.rel (%p34) target = $region8
    $region5: #{tpu_custom_call.1} parent=1 // loop_body
      %s38 = ssub.s32 %s33, 1
      %s39 = ssub.s32 %s33, 2
      %s46 = sadd.s32 1, %s41
      %p47 = scmp.ge.s32.totalorder %s46, 1
      %s48 = scalar_select %p47, 0, %s46
      %s49 = sadd.s32 1, %s40
      %s50 = scalar_select %p47, %s49, %s40
      %p51 = scmp.ge.s32.totalorder %s50, 2
      %s52 = scalar_select %p51, 0, %s50
      %s53 = ssub.s32 %s40, %s52
      %s54 = ssub.s32 %s41, %s48
      %s55 = sor.u32 %s53, %s54
      %p56 = scmp.eq.s32.totalorder %s55, 0
      %s58 = sadd.s32 %s57, 1
      %s59 = scalar_select %p56, %s57, %s58
      %p62 = pneg %p56
      %p63 = scmp.eq.s32.totalorder %s33, 1
      %p64 = por %p62, %p63
      %p65 = scmp.ne.s32.totalorder %s57, %s60
      %p66 = scmp.eq.s32.totalorder %s33, 0
      %p67 = por %p65, %p66
      %p68 = scmp.ne.s32.totalorder %s57, %s60
      %p69 = scmp.eq.s32.totalorder %s38, 1
      %p70 = por %p68, %p69
      %p71 = scmp.ne.s32.totalorder %s60, %s61
      %p72 = scmp.eq.s32.totalorder %s38, 0
      %p73 = por %p71, %p72
      %p74 = scmp.ne.s32.totalorder %s60, %s61
      %p75 = scmp.eq.s32.totalorder %s39, 1
      %p76 = por %p74, %p75
      %p78 = scmp.ne.s32.totalorder %s61, %s77
      %p79 = scmp.eq.s32.totalorder %s39, 0
      %p80 = por %p78, %p79
      %s81 = ssub.s32 %s40, %s52
      %p82 = scmp.eq.s32.totalorder %s81, 0
      %s84 = sadd.s32 %s83, 1
      %s85 = scalar_select %p82, %s83, %s84
      %p88 = pneg %p82
      %p89 = scmp.eq.s32.totalorder %s33, 1
      %p90 = por %p88, %p89
      %p91 = scmp.ne.s32.totalorder %s83, %s86
      %p92 = scmp.eq.s32.totalorder %s33, 0
      %p93 = por %p91, %p92
      %p94 = scmp.ne.s32.totalorder %s83, %s86
      %p95 = scmp.eq.s32.totalorder %s38, 1
      %p96 = por %p94, %p95
      %p97 = scmp.ne.s32.totalorder %s86, %s87
      %p98 = scmp.eq.s32.totalorder %s38, 0
      %p99 = por %p97, %p98
      %p100 = scmp.ne.s32.totalorder %s86, %s87
      %p101 = scmp.eq.s32.totalorder %s39, 1
      %p102 = por %p100, %p101
      %p104 = scmp.ne.s32.totalorder %s87, %s103
      %p105 = scmp.eq.s32.totalorder %s39, 0
      %p106 = por %p104, %p105
      %s107 = ssub.s32 %s40, %s52
      %p108 = scmp.eq.s32.totalorder %s107, 0
      %s110 = sadd.s32 %s109, 1
      %s111 = scalar_select %p108, %s109, %s110
      %p114 = pneg %p108
      %p115 = scmp.eq.s32.totalorder %s33, 1
      %p116 = por %p114, %p115
      %p117 = scmp.ne.s32.totalorder %s109, %s112
      %p118 = scmp.eq.s32.totalorder %s33, 0
      %p119 = por %p117, %p118
      %p120 = scmp.ne.s32.totalorder %s109, %s112
      %p121 = scmp.eq.s32.totalorder %s38, 1
      %p122 = por %p120, %p121
      %p123 = scmp.ne.s32.totalorder %s112, %s113
      %p124 = scmp.eq.s32.totalorder %s38, 0
      %p125 = por %p123, %p124
      %p126 = scmp.ne.s32.totalorder %s112, %s113
      %p127 = scmp.eq.s32.totalorder %s39, 1
      %p128 = por %p126, %p127
      %p130 = scmp.ne.s32.totalorder %s113, %s129
      %p131 = scmp.eq.s32.totalorder %s39, 0
      %p132 = por %p130, %p131
      %s134 = sadd.s32 %s133, 1
      %p137 = scmp.eq.s32.totalorder %s33, 1
      %p138 = scmp.ne.s32.totalorder %s133, %s135
      %p139 = scmp.eq.s32.totalorder %s33, 0
      %p140 = por %p138, %p139
      %p141 = scmp.ne.s32.totalorder %s133, %s135
      %p142 = scmp.eq.s32.totalorder %s38, 1
      %p143 = por %p141, %p142
      %p144 = scmp.ne.s32.totalorder %s135, %s136
      %p145 = scmp.eq.s32.totalorder %s38, 0
      %p146 = por %p144, %p145
      %p147 = scmp.ne.s32.totalorder %s135, %s136
      %p148 = scmp.eq.s32.totalorder %s39, 1
      %p149 = por %p147, %p148
      %p151 = scmp.ne.s32.totalorder %s136, %s150
      %p152 = scmp.eq.s32.totalorder %s39, 0
      %p153 = por %p151, %p152
      %s155 = sadd.s32 %s154, 1
      %p158 = scmp.eq.s32.totalorder %s33, 1
      %p159 = scmp.ne.s32.totalorder %s154, %s156
      %p160 = scmp.eq.s32.totalorder %s33, 0
      %p161 = por %p159, %p160
      %p162 = scmp.ne.s32.totalorder %s154, %s156
      %p163 = scmp.eq.s32.totalorder %s38, 1
      %p164 = por %p162, %p163
      %p165 = scmp.ne.s32.totalorder %s156, %s157
      %p166 = scmp.eq.s32.totalorder %s38, 0
      %p167 = por %p165, %p166
      %p168 = scmp.ne.s32.totalorder %s156, %s157
      %p169 = scmp.eq.s32.totalorder %s39, 1
      %p170 = por %p168, %p169
      %p172 = scmp.ne.s32.totalorder %s157, %s171
      %p173 = scmp.eq.s32.totalorder %s39, 0
      %p174 = por %p172, %p173
      %s176 = sadd.s32 %s175, 1
      %p179 = scmp.eq.s32.totalorder %s33, 1
      %p180 = scmp.ne.s32.totalorder %s175, %s177
      %p181 = scmp.eq.s32.totalorder %s33, 0
      %p182 = por %p180, %p181
      %p183 = scmp.ne.s32.totalorder %s175, %s177
      %p184 = scmp.eq.s32.totalorder %s38, 1
      %p185 = por %p183, %p184
      %p186 = scmp.ne.s32.totalorder %s177, %s178
      %p187 = scmp.eq.s32.totalorder %s38, 0
      %p188 = por %p186, %p187
      %p189 = scmp.ne.s32.totalorder %s177, %s178
      %p190 = scmp.eq.s32.totalorder %s39, 1
      %p191 = por %p189, %p190
      %p193 = scmp.ne.s32.totalorder %s178, %s192
      %p194 = scmp.eq.s32.totalorder %s39, 0
      %p195 = por %p193, %p194
      %s197 = sadd.s32 %s196, 1
      %p200 = scmp.eq.s32.totalorder %s33, 1
      %p201 = scmp.ne.s32.totalorder %s196, %s198
      %p202 = scmp.eq.s32.totalorder %s33, 0
      %p203 = por %p201, %p202
      %p204 = scmp.ne.s32.totalorder %s196, %s198
      %p205 = scmp.eq.s32.totalorder %s38, 1
      %p206 = por %p204, %p205
      %p207 = scmp.ne.s32.totalorder %s198, %s199
      %p208 = scmp.eq.s32.totalorder %s38, 0
      %p209 = por %p207, %p208
      %p210 = scmp.ne.s32.totalorder %s198, %s199
      %p211 = scmp.eq.s32.totalorder %s39, 1
      %p212 = por %p210, %p211
      %p214 = scmp.ne.s32.totalorder %s199, %s213
      %p215 = scmp.eq.s32.totalorder %s39, 0
      %p216 = por %p214, %p215
      %s218 = sadd.s32 %s217, 1
      %p221 = scmp.eq.s32.totalorder %s33, 1
      %p222 = scmp.ne.s32.totalorder %s217, %s219
      %p223 = scmp.eq.s32.totalorder %s33, 0
      %p224 = por %p222, %p223
      %p225 = scmp.ne.s32.totalorder %s217, %s219
      %p226 = scmp.eq.s32.totalorder %s38, 1
      %p227 = por %p225, %p226
      %p228 = scmp.ne.s32.totalorder %s219, %s220
      %p229 = scmp.eq.s32.totalorder %s38, 0
      %p230 = por %p228, %p229
      %p231 = scmp.ne.s32.totalorder %s219, %s220
      %p232 = scmp.eq.s32.totalorder %s39, 1
      %p233 = por %p231, %p232
      %p235 = scmp.ne.s32.totalorder %s220, %s234
      %p236 = scmp.eq.s32.totalorder %s39, 0
      %p237 = por %p235, %p236
      %s239 = sadd.s32 %s238, 1
      %p242 = scmp.eq.s32.totalorder %s33, 1
      %p243 = scmp.ne.s32.totalorder %s238, %s240
      %p244 = scmp.eq.s32.totalorder %s33, 0
      %p245 = por %p243, %p244
      %p246 = scmp.ne.s32.totalorder %s238, %s240
      %p247 = scmp.eq.s32.totalorder %s38, 1
      %p248 = por %p246, %p247
      %p249 = scmp.ne.s32.totalorder %s240, %s241
      %p250 = scmp.eq.s32.totalorder %s38, 0
      %p251 = por %p249, %p250
      %p252 = scmp.ne.s32.totalorder %s240, %s241
      %p253 = scmp.eq.s32.totalorder %s39, 1
      %p254 = por %p252, %p253
      %p256 = scmp.ne.s32.totalorder %s241, %s255
      %p257 = scmp.eq.s32.totalorder %s39, 0
      %p258 = por %p256, %p257
      %s260 = sadd.s32 %s259, 1
      %p263 = scmp.eq.s32.totalorder %s33, 1
      %p264 = scmp.ne.s32.totalorder %s259, %s261
      %p265 = scmp.eq.s32.totalorder %s33, 0
      %p266 = por %p264, %p265
      %p267 = scmp.ne.s32.totalorder %s259, %s261
      %p268 = scmp.eq.s32.totalorder %s38, 1
      %p269 = por %p267, %p268
      %p270 = scmp.ne.s32.totalorder %s261, %s262
      %p271 = scmp.eq.s32.totalorder %s38, 0
      %p272 = por %p270, %p271
      %p273 = scmp.ne.s32.totalorder %s261, %s262
      %p274 = scmp.eq.s32.totalorder %s39, 1
      %p275 = por %p273, %p274
      %p277 = scmp.ne.s32.totalorder %s262, %s276
      %p278 = scmp.eq.s32.totalorder %s39, 0
      %p279 = por %p277, %p278
      %s281 = sadd.s32 %s280, 1
      %p284 = scmp.eq.s32.totalorder %s33, 1
      %p285 = scmp.ne.s32.totalorder %s280, %s282
      %p286 = scmp.eq.s32.totalorder %s33, 0
      %p287 = por %p285, %p286
      %p288 = scmp.ne.s32.totalorder %s280, %s282
      %p289 = scmp.eq.s32.totalorder %s38, 1
      %p290 = por %p288, %p289
      %p291 = scmp.ne.s32.totalorder %s282, %s283
      %p292 = scmp.eq.s32.totalorder %s38, 0
      %p293 = por %p291, %p292
      %p294 = scmp.ne.s32.totalorder %s282, %s283
      %p295 = scmp.eq.s32.totalorder %s39, 1
      %p296 = por %p294, %p295
      %p298 = scmp.ne.s32.totalorder %s283, %s297
      %p299 = scmp.eq.s32.totalorder %s39, 0
      %p300 = por %p298, %p299
      %s301 = ssub.s32 %s40, %s52
      %s302 = ssub.s32 %s41, %s48
      %s303 = sor.u32 %s301, %s302
      %p304 = scmp.eq.s32.totalorder %s303, 0
      %s306 = sadd.s32 %s305, 1
      %s307 = scalar_select %p304, %s305, %s306
      %p310 = pneg %p304
      %p311 = scmp.eq.s32.totalorder %s33, 1
      %p312 = por %p310, %p311
      %p313 = scmp.ne.s32.totalorder %s305, %s308
      %p314 = scmp.eq.s32.totalorder %s33, 0
      %p315 = por %p313, %p314
      %p316 = scmp.ne.s32.totalorder %s305, %s308
      %p317 = scmp.eq.s32.totalorder %s38, 1
      %p318 = por %p316, %p317
      %p319 = scmp.ne.s32.totalorder %s308, %s309
      %p320 = scmp.eq.s32.totalorder %s38, 0
      %p321 = por %p319, %p320
      %p322 = scmp.ne.s32.totalorder %s308, %s309
      %p323 = scmp.eq.s32.totalorder %s39, 1
      %p324 = por %p322, %p323
      %p326 = scmp.ne.s32.totalorder %s309, %s325
      %p327 = scmp.eq.s32.totalorder %s39, 0
      %p328 = por %p326, %p327
      %s329 = ssub.s32 %s40, %s52
      %s330 = ssub.s32 %s41, %s48
      %s331 = sor.u32 %s329, %s330
      %p332 = scmp.eq.s32.totalorder %s331, 0
      %s334 = sadd.s32 %s333, 1
      %s335 = scalar_select %p332, %s333, %s334
      %p338 = pneg %p332
      %p339 = scmp.eq.s32.totalorder %s33, 1
      %p340 = por %p338, %p339
      %p341 = scmp.ne.s32.totalorder %s333, %s336
      %p342 = scmp.eq.s32.totalorder %s33, 0
      %p343 = por %p341, %p342
      %p344 = scmp.ne.s32.totalorder %s333, %s336
      %p345 = scmp.eq.s32.totalorder %s38, 1
      %p346 = por %p344, %p345
      %p347 = scmp.ne.s32.totalorder %s336, %s337
      %p348 = scmp.eq.s32.totalorder %s38, 0
      %p349 = por %p347, %p348
      %p350 = scmp.ne.s32.totalorder %s336, %s337
      %p351 = scmp.eq.s32.totalorder %s39, 1
      %p352 = por %p350, %p351
      %p354 = scmp.ne.s32.totalorder %s337, %s353
      %p355 = scmp.eq.s32.totalorder %s39, 0
      %p356 = por %p354, %p355
      %p357 = scmp.le.s32.totalorder 1, %s33
      %p358 = scmp.lt.s32.totalorder %s33, 3
      %p359 = pnand %p357, %p358
      %p360 = pneg %p359
      // Predicated region
      $region9: #{tpu_custom_call.1} parent=5 // pred_check
        _
      $region10: #{tpu_custom_call.1} parent=5 // pred_check_branch
        %362 = sbr.rel (%p359) target = $region12
      $region11: #{tpu_custom_call.1} parent=5 // pred_region
        %s363 = ssub.s32 %s33, 1
        // Predicated region
        $region13: #{tpu_custom_call.1} parent=11 // pred_check
          %p364 = pneg %p146
        $region14: #{tpu_custom_call.1} parent=11 // pred_check_branch
          %366 = sbr.rel (%p364) target = $region16
        $region15: #{tpu_custom_call.1} parent=11 // pred_region
          %368 = vsyncadd [#allocation11], 0
          %s369 = sshll.u32 %s3, 4
          %s370 = int_to_ptr.hbm [resolvable:$true] %s369
          %s371 = sshll.u32 [#allocation10], 4
          %s372 = int_to_ptr.vmem [resolvable:$true] %s371
          %377 = dma.hbm_to_vmem [thread:$0]  %s370, 256, %s372, [#allocation11], 128, 128, 8
        $region16: #{tpu_custom_call.1} parent=11 // pred_fallthru
          _
        // Predicated region
        $region17: #{tpu_custom_call.1} parent=11 // pred_check
          %p378 = pneg %p167
        $region18: #{tpu_custom_call.1} parent=11 // pred_check_branch
          %380 = sbr.rel (%p378) target = $region20
        $region19: #{tpu_custom_call.1} parent=11 // pred_region
          _
        $region20: #{tpu_custom_call.1} parent=11 // pred_fallthru
          _
        // Predicated region
        $region21: #{tpu_custom_call.1} parent=11 // pred_check
          %p381 = pneg %p188
        $region22: #{tpu_custom_call.1} parent=11 // pred_check_branch
          %383 = sbr.rel (%p381) target = $region24
        $region23: #{tpu_custom_call.1} parent=11 // pred_region
          %385 = vsyncadd [#allocation11], 0
          %s386 = sshll.u32 %s5, 4
          %s387 = int_to_ptr.hbm [resolvable:$true] %s386
          %s388 = sshll.u32 [#allocation12], 4
          %s389 = int_to_ptr.vmem [resolvable:$true] %s388
          %394 = dma.hbm_to_vmem [thread:$0]  %s387, 256, %s389, [#allocation11], 128, 128, 8
        $region24: #{tpu_custom_call.1} parent=11 // pred_fallthru
          _
        // Predicated region
        $region25: #{tpu_custom_call.1} parent=11 // pred_check
          %p395 = pneg %p209
        $region26: #{tpu_custom_call.1} parent=11 // pred_check_branch
          %397 = sbr.rel (%p395) target = $region28
        $region27: #{tpu_custom_call.1} parent=11 // pred_region
          _
        $region28: #{tpu_custom_call.1} parent=11 // pred_fallthru
          _
        // Predicated region
        $region29: #{tpu_custom_call.1} parent=11 // pred_check
          %p398 = pneg %p230
        $region30: #{tpu_custom_call.1} parent=11 // pred_check_branch
          %400 = sbr.rel (%p398) target = $region32
        $region31: #{tpu_custom_call.1} parent=11 // pred_region
          %402 = vsyncadd [#allocation14], 0
          %s403 = sshll.u32 %s7, 4
          %s404 = int_to_ptr.hbm [resolvable:$true] %s403
          %s405 = sshll.u32 [#allocation13], 4
          %s406 = int_to_ptr.vmem [resolvable:$true] %s405
          %411 = dma.hbm_to_vmem [thread:$0]  %s404, 256, %s406, [#allocation14], 128, 128, 8
        $region32: #{tpu_custom_call.1} parent=11 // pred_fallthru
          _
        // Predicated region
        $region33: #{tpu_custom_call.1} parent=11 // pred_check
          %p412 = pneg %p251
        $region34: #{tpu_custom_call.1} parent=11 // pred_check_branch
          %414 = sbr.rel (%p412) target = $region36
        $region35: #{tpu_custom_call.1} parent=11 // pred_region
          _
        $region36: #{tpu_custom_call.1} parent=11 // pred_fallthru
          _
        // Predicated region
        $region37: #{tpu_custom_call.1} parent=11 // pred_check
          %p415 = pneg %p272
        $region38: #{tpu_custom_call.1} parent=11 // pred_check_branch
          %417 = sbr.rel (%p415) target = $region40
        $region39: #{tpu_custom_call.1} parent=11 // pred_region
          %419 = vsyncadd [#allocation14], 0
          %s420 = sshll.u32 %s9, 4
          %s421 = int_to_ptr.hbm [resolvable:$true] %s420
          %s422 = sshll.u32 [#allocation15], 4
          %s423 = int_to_ptr.vmem [resolvable:$true] %s422
          %428 = dma.hbm_to_vmem [thread:$0]  %s421, 512, %s423, [#allocation14], 128, 128, 8
        $region40: #{tpu_custom_call.1} parent=11 // pred_fallthru
          _
        // Predicated region
        $region41: #{tpu_custom_call.1} parent=11 // pred_check
          %p429 = pneg %p293
        $region42: #{tpu_custom_call.1} parent=11 // pred_check_branch
          %431 = sbr.rel (%p429) target = $region44
        $region43: #{tpu_custom_call.1} parent=11 // pred_region
          _
        $region44: #{tpu_custom_call.1} parent=11 // pred_fallthru
          _
      $region12: #{tpu_custom_call.1} parent=5 // pred_fallthru
        _
      %p432 = scmp.lt.s32.totalorder %s33, 2
      // Predicated region
      $region45: #{tpu_custom_call.1} parent=5 // pred_check
        %p433 = pneg %p432
      $region46: #{tpu_custom_call.1} parent=5 // pred_check_branch
        %435 = sbr.rel (%p433) target = $region48
      $region47: #{tpu_custom_call.1} parent=5 // pred_region
        // Predicated region
        $region49: #{tpu_custom_call.1} parent=47 // pred_check
          %p436 = pneg %p67
        $region50: #{tpu_custom_call.1} parent=47 // pred_check_branch
          %438 = sbr.rel (%p436) target = $region52
        $region51: #{tpu_custom_call.1} parent=47 // pred_region
          %s439 = sand.u32 %s57, 1
          %s440 = scalar_lea.sflag [#allocation5], %s439
          %s441 = sand.u32 %s57, 1
          %s442 = smul.addr %s441, 8
          %s443 = scalar_lea.vmem [#allocation4], %s442
          %445 = vsyncadd %s440, 0
          %s446 = sadd.s32 %s41, %s40
          %s447 = smul.addr %s446, 8
          %s448 = scalar_lea.hbm %s0, %s447
          %s450 = sshll.u32 %s448, 4
          %s451 = int_to_ptr.hbm [resolvable:$true] %s450
          %s452 = sshll.u32 %s443, 4
          %s453 = int_to_ptr.vmem [resolvable:$true] %s452
          %455 = dma.hbm_to_vmem [thread:$0]  %s451, 128, %s453, %s440
        $region52: #{tpu_custom_call.1} parent=47 // pred_fallthru
          _
        // Predicated region
        $region53: #{tpu_custom_call.1} parent=47 // pred_check
          %p456 = pneg %p93
        $region54: #{tpu_custom_call.1} parent=47 // pred_check_branch
          %458 = sbr.rel (%p456) target = $region56
        $region55: #{tpu_custom_call.1} parent=47 // pred_region
          %s459 = sand.u32 %s33, 1
          %s460 = scalar_lea.sflag [#allocation8], %s459
          %s461 = sand.u32 %s83, 1
          %s462 = smul.addr %s461, 8
          %s463 = scalar_lea.vmem [#allocation7], %s462
          %465 = vsyncadd %s460, 0
          %s466 = smul.addr %s40, 8
          %s467 = scalar_lea.hbm %s1, %s466
          %s469 = sshll.u32 %s467, 4
          %s470 = int_to_ptr.hbm [resolvable:$true] %s469
          %s471 = sshll.u32 %s463, 4
          %s472 = int_to_ptr.vmem [resolvable:$true] %s471
          %474 = dma.hbm_to_vmem [thread:$0]  %s470, 128, %s472, %s460
        $region56: #{tpu_custom_call.1} parent=47 // pred_fallthru
          _
        // Predicated region
        $region57: #{tpu_custom_call.1} parent=47 // pred_check
          %p475 = pneg %p119
        $region58: #{tpu_custom_call.1} parent=47 // pred_check_branch
          %477 = sbr.rel (%p475) target = $region60
        $region59: #{tpu_custom_call.1} parent=47 // pred_region
          %s478 = sand.u32 %s33, 1
          %s479 = scalar_lea.sflag [#allocation8], %s478
          %s480 = sand.u32 %s109, 1
          %s481 = smul.addr %s480, 8
          %s482 = scalar_lea.vmem [#allocation9], %s481
          %484 = vsyncadd %s479, 0
          %s485 = smul.addr %s40, 8
          %s486 = scalar_lea.hbm %s2, %s485
          %s488 = sshll.u32 %s486, 4
          %s489 = int_to_ptr.hbm [resolvable:$true] %s488
          %s490 = sshll.u32 %s482, 4
          %s491 = int_to_ptr.vmem [resolvable:$true] %s490
          %493 = dma.hbm_to_vmem [thread:$0]  %s489, 128, %s491, %s479
        $region60: #{tpu_custom_call.1} parent=47 // pred_fallthru
          _
      $region48: #{tpu_custom_call.1} parent=5 // pred_fallthru
        _
      %p494 = scmp.le.s32.totalorder 1, %s33
      %p495 = scmp.lt.s32.totalorder %s33, 3
      %p496 = pnand %p494, %p495
      %p497 = pneg %p496
      // Predicated region
      $region61: #{tpu_custom_call.1} parent=5 // pred_check
        _
      $region62: #{tpu_custom_call.1} parent=5 // pred_check_branch
        %499 = sbr.rel (%p496) target = $region64
      $region63: #{tpu_custom_call.1} parent=5 // pred_region
        %s500 = ssub.s32 %s33, 1
        %s501 = sand.u32 %s60, 1
        %s502 = scalar_lea.sflag [#allocation5], %s501
        %s503 = sand.u32 %s60, 1
        %s504 = smul.addr %s503, 8
        %s505 = scalar_lea.vmem [#allocation4], %s504
        // Predicated region
        $region65: #{tpu_custom_call.1} parent=63 // pred_check
          %p506 = pneg %p73
        $region66: #{tpu_custom_call.1} parent=63 // pred_check_branch
          %508 = sbr.rel (%p506) target = $region68
        $region67: #{tpu_custom_call.1} parent=63 // pred_region
          %510 = dma.done %s502, 128
        $region68: #{tpu_custom_call.1} parent=63 // pred_fallthru
          _
        %s511 = sand.u32 %s38, 1
        %s512 = scalar_lea.sflag [#allocation8], %s511
        %s513 = sand.u32 %s86, 1
        %s514 = smul.addr %s513, 8
        %s515 = scalar_lea.vmem [#allocation7], %s514
        // Predicated region
        $region69: #{tpu_custom_call.1} parent=63 // pred_check
          %p516 = pneg %p99
        $region70: #{tpu_custom_call.1} parent=63 // pred_check_branch
          %518 = sbr.rel (%p516) target = $region72
        $region71: #{tpu_custom_call.1} parent=63 // pred_region
          %520 = dma.done %s512, 128
        $region72: #{tpu_custom_call.1} parent=63 // pred_fallthru
          _
        %s521 = sand.u32 %s38, 1
        %s522 = scalar_lea.sflag [#allocation8], %s521
        %s523 = sand.u32 %s112, 1
        %s524 = smul.addr %s523, 8
        %s525 = scalar_lea.vmem [#allocation9], %s524
        // Predicated region
        $region73: #{tpu_custom_call.1} parent=63 // pred_check
          %p526 = pneg %p125
        $region74: #{tpu_custom_call.1} parent=63 // pred_check_branch
          %528 = sbr.rel (%p526) target = $region76
        $region75: #{tpu_custom_call.1} parent=63 // pred_region
          %530 = dma.done %s522, 128
        $region76: #{tpu_custom_call.1} parent=63 // pred_fallthru
          _
        // Predicated region
        $region77: #{tpu_custom_call.1} parent=63 // pred_check
          %p531 = pneg %p146
        $region78: #{tpu_custom_call.1} parent=63 // pred_check_branch
          %533 = sbr.rel (%p531) target = $region80
        $region79: #{tpu_custom_call.1} parent=63 // pred_region
          %535 = dma.done [#allocation11], 256
        $region80: #{tpu_custom_call.1} parent=63 // pred_fallthru
          _
        // Predicated region
        $region81: #{tpu_custom_call.1} parent=63 // pred_check
          %p536 = pneg %p188
        $region82: #{tpu_custom_call.1} parent=63 // pred_check_branch
          %538 = sbr.rel (%p536) target = $region84
        $region83: #{tpu_custom_call.1} parent=63 // pred_region
          %540 = dma.done [#allocation11], 256
        $region84: #{tpu_custom_call.1} parent=63 // pred_fallthru
          _
        // Predicated region
        $region85: #{tpu_custom_call.1} parent=63 // pred_check
          %p541 = pneg %p230
        $region86: #{tpu_custom_call.1} parent=63 // pred_check_branch
          %543 = sbr.rel (%p541) target = $region88
        $region87: #{tpu_custom_call.1} parent=63 // pred_region
          %545 = dma.done [#allocation14], 256
        $region88: #{tpu_custom_call.1} parent=63 // pred_fallthru
          _
        // Predicated region
        $region89: #{tpu_custom_call.1} parent=63 // pred_check
          %p546 = pneg %p272
        $region90: #{tpu_custom_call.1} parent=63 // pred_check_branch
          %548 = sbr.rel (%p546) target = $region92
        $region91: #{tpu_custom_call.1} parent=63 // pred_region
          %550 = dma.done [#allocation14], 512
        $region92: #{tpu_custom_call.1} parent=63 // pred_fallthru
          _
        %s551 = sand.u32 %s60, 1
        %s552 = scalar_lea.sflag [#allocation5], %s551
        %s553 = sand.u32 %s60, 1
        %s554 = smul.addr %s553, 8
        %s555 = scalar_lea.vmem [#allocation4], %s554
        %p556 = pneg %p73
        %p557 = pneg %p70
        %s558 = sand.u32 %s38, 1
        %s559 = scalar_lea.sflag [#allocation8], %s558
        %s560 = sand.u32 %s86, 1
        %s561 = smul.addr %s560, 8
        %s562 = scalar_lea.vmem [#allocation7], %s561
        %p563 = pneg %p99
        %p564 = pneg %p96
        %s565 = sand.u32 %s38, 1
        %s566 = scalar_lea.sflag [#allocation8], %s565
        %s567 = sand.u32 %s112, 1
        %s568 = smul.addr %s567, 8
        %s569 = scalar_lea.vmem [#allocation9], %s568
        %p570 = pneg %p125
        %p571 = pneg %p122
        %p572 = pneg %p146
        %p573 = pneg %p143
        %p574 = pneg %p167
        %p575 = pneg %p164
        %p576 = pneg %p188
        %p577 = pneg %p185
        %p578 = pneg %p209
        %p579 = pneg %p206
        %p580 = pneg %p230
        %p581 = pneg %p227
        %p582 = pneg %p251
        %p583 = pneg %p248
        %p584 = pneg %p272
        %p585 = pneg %p269
        %p586 = pneg %p293
        %p587 = pneg %p290
        %p588 = pneg %p321
        %p589 = pneg %p318
        %s590 = sand.u32 %s308, 1
        %s591 = scalar_lea.sflag [#allocation6], %s590
        %s592 = sand.u32 %s308, 1
        %s593 = smul.addr %s592, 8
        %s594 = scalar_lea.vmem [#allocation16], %s593
        %p595 = pneg %p349
        %p596 = pneg %p346
        %s597 = sand.u32 %s336, 1
        %s598 = scalar_lea.sflag [#allocation18], %s597
        %s599 = sand.u32 %s336, 1
        %s600 = smul.addr %s599, 32
        %s601 = scalar_lea.vmem [#allocation17], %s600
        %p602 = scmp.eq.s32.totalorder %s43, 0
        // Predicated region
        $region93: #{tpu_custom_call.1} parent=63 // pred_check
          %p603 = pneg %p602
        $region94: #{tpu_custom_call.1} parent=63 // pred_check_branch
          %605 = sbr.rel (%p603) target = $region96
        $region95: #{tpu_custom_call.1} parent=63 // pred_region
          %v606 = vld [vmem:[%s515] sm:$0xff]
          %v607 = vld [vmem:[%s525] sm:$0xff]
          %v608 = vld [vmem:[#allocation12] sm:$0xff]
          %v609 = vld [vmem:[#allocation12 + $0x8] sm:$0xff]
          %v610 = vld [vmem:[%s6] sm:$0x1]
          %v612 = vperm.slane %v610, 0
          %vm614 = vcmask 130048
          %v616 = vsel %vm614, %v606, 0
          %618 = vmatpush.msra.mxu0 0.0
          %619 = vmatpush.msra.mxu0 0.0
          %620 = vmatpush.msra.mxu0 0.0
          %621 = vmatpush.msra.mxu0 0.0
          %622 = vmatpush.msra.mxu0 0.0
          %623 = vmatpush.msra.mxu0 0.0
          %624 = vmatpush.msra.mxu0 0.0
          %625 = vmatpush.msra.mxu0 0.0
          %626 = vmatpush.msra.mxu0 0.0
          %627 = vmatpush.msra.mxu0 0.0
          %628 = vmatpush.msra.mxu0 0.0
          %629 = vmatpush.msra.mxu0 0.0
          %630 = vmatpush.msra.mxu0 0.0
          %631 = vmatpush.msra.mxu0 0.0
          %632 = vmatpush.msra.mxu0 %v609
          %633 = vmatpush.msra.mxu0 %v608
          %634 = vmatmul.f32.gmra.mxu0 %v616
          %v635 = vpop.f32.mrf.mxu0
          %v636 = vadd.f32 %v612, %v635
          %637 = vdwg.mxu0
          %v638 = vld [vmem:[#allocation13] sm:$0xff]
          %v639 = vld [vmem:[#allocation13 + $0x8] sm:$0xff]
          %v640 = vld [vmem:[%s8] sm:$0x1]
          %v642 = vperm.slane %v640, 0
          %v645 = vsel %vm614, %v607, 0
          %647 = vmatpush.msra.mxu0 0.0
          %648 = vmatpush.msra.mxu0 0.0
          %649 = vmatpush.msra.mxu0 0.0
          %650 = vmatpush.msra.mxu0 0.0
          %651 = vmatpush.msra.mxu0 0.0
          %652 = vmatpush.msra.mxu0 0.0
          %653 = vmatpush.msra.mxu0 0.0
          %654 = vmatpush.msra.mxu0 0.0
          %655 = vmatpush.msra.mxu0 0.0
          %656 = vmatpush.msra.mxu0 0.0
          %657 = vmatpush.msra.mxu0 0.0
          %658 = vmatpush.msra.mxu0 0.0
          %659 = vmatpush.msra.mxu0 0.0
          %660 = vmatpush.msra.mxu0 0.0
          %661 = vmatpush.msra.mxu0 %v639
          %662 = vmatpush.msra.mxu0 %v638
          %663 = vmatmul.f32.gmra.mxu0 %v645
          %v664 = vpop.f32.mrf.mxu0
          %v665 = vadd.f32 %v642, %v664
          %666 = vdwg.mxu0
          %vm667 = vcmask 261120
          %668 = vst.msk [vmem:[#allocation2] sm:$0xff] %vm667, %v636
          %669 = vst.msk [vmem:[#allocation3] sm:$0xff] %vm667, %v665
        $region96: #{tpu_custom_call.1} parent=63 // pred_fallthru
          _
        %v670 = vld [vmem:[%s505] sm:$0xff]
        %v671 = vld [vmem:[#allocation10] sm:$0xff]
        %v672 = vld [vmem:[#allocation10 + $0x8] sm:$0xff]
        %v673 = vld [vmem:[%s4] sm:$0x1]
        %v675 = vperm.slane %v673, 0
        %vm677 = vcmask 130048
        %v679 = vsel %vm677, %v670, 0
        %681 = vmatpush.msra.mxu0 0.0
        %682 = vmatpush.msra.mxu0 0.0
        %683 = vmatpush.msra.mxu0 0.0
        %684 = vmatpush.msra.mxu0 0.0
        %685 = vmatpush.msra.mxu0 0.0
        %686 = vmatpush.msra.mxu0 0.0
        %687 = vmatpush.msra.mxu0 0.0
        %688 = vmatpush.msra.mxu0 0.0
        %689 = vmatpush.msra.mxu0 0.0
        %690 = vmatpush.msra.mxu0 0.0
        %691 = vmatpush.msra.mxu0 0.0
        %692 = vmatpush.msra.mxu0 0.0
        %693 = vmatpush.msra.mxu0 0.0
        %694 = vmatpush.msra.mxu0 0.0
        %695 = vmatpush.msra.mxu0 %v672
        %696 = vmatpush.msra.mxu0 %v671
        %697 = vmatmul.f32.gmra.mxu0 %v679
        %v698 = vpop.f32.mrf.mxu0
        %v699 = vadd.f32 %v675, %v698
        %700 = vdwg.mxu0
        %v701 = vmul.f32 %v699, 0.35355338
        %703 = vrot.lane.b32.xlu0 %v701, 120
        %v704 = vpop.permute.xlu0 %703
        %705 = vrot.lane.b32.xlu0 %v701, 112
        %v706 = vpop.permute.xlu0 %705
        %707 = vrot.lane.b32.xlu0 %v701, 104
        %v708 = vpop.permute.xlu0 %707
        %v709 = vld [vmem:[#allocation2] sm:$0xff]
        %711 = vrot.lane.b32.xlu0 %v709, 120
        %v712 = vpop.permute.xlu0 %711
        %714 = vrot.lane.b32.xlu0 %v709, 112
        %v715 = vpop.permute.xlu0 %714
        %717 = vrot.lane.b32.xlu0 %v709, 104
        %v718 = vpop.permute.xlu0 %717
        %v720 = vld [vmem:[#allocation3] sm:$0xff]
        %722 = vrot.lane.b32.xlu0 %v720, 120
        %v723 = vpop.permute.xlu0 %722
        %725 = vrot.lane.b32.xlu0 %v720, 112
        %v726 = vpop.permute.xlu0 %725
        %728 = vrot.lane.b32.xlu0 %v720, 104
        %v729 = vpop.permute.xlu0 %728
        %731 = vxpose.xlu0.b32.start [1/16] %v709, 128
        %732 = vxpose.xlu0.b32.cont [2/16] 0.0, 128
        %733 = vxpose.xlu0.b32.cont [3/16] 0.0, 128
        %734 = vxpose.xlu0.b32.cont [4/16] 0.0, 128
        %735 = vxpose.xlu0.b32.cont [5/16] 0.0, 128
        %736 = vxpose.xlu0.b32.cont [6/16] 0.0, 128
        %737 = vxpose.xlu0.b32.cont [7/16] 0.0, 128
        %738 = vxpose.xlu0.b32.cont [8/16] 0.0, 128
        %739 = vxpose.xlu0.b32.cont [9/16] 0.0, 128
        %740 = vxpose.xlu0.b32.cont [10/16] 0.0, 128
        %741 = vxpose.xlu0.b32.cont [11/16] 0.0, 128
        %742 = vxpose.xlu0.b32.cont [12/16] 0.0, 128
        %743 = vxpose.xlu0.b32.cont [13/16] 0.0, 128
        %744 = vxpose.xlu0.b32.cont [14/16] 0.0, 128
        %745 = vxpose.xlu0.b32.cont [15/16] 0.0, 128
        %746 = vxpose.xlu0.b32.end [16/16] 0.0, 128
        %v747 = vpop.trf.xlu0
        %v748 = vpop.trf.xlu0
        %v749 = vpop.trf.xlu0
        %v750 = vpop.trf.xlu0
        %v751 = vpop.trf.xlu0
        %v752 = vpop.trf.xlu0
        %v753 = vpop.trf.xlu0
        %v754 = vpop.trf.xlu0
        %v755 = vpop.trf.xlu0
        %v756 = vpop.trf.xlu0
        %v757 = vpop.trf.xlu0
        %v758 = vpop.trf.xlu0
        %v759 = vpop.trf.xlu0
        %v760 = vpop.trf.xlu0
        %v761 = vpop.trf.xlu0
        %v762 = vpop.trf.xlu0
        %763 = vxpose.xlu0.b32.start [1/16] %v712, 128
        %764 = vxpose.xlu0.b32.cont [2/16] 0.0, 128
        %765 = vxpose.xlu0.b32.cont [3/16] 0.0, 128
        %766 = vxpose.xlu0.b32.cont [4/16] 0.0, 128
        %767 = vxpose.xlu0.b32.cont [5/16] 0.0, 128
        %768 = vxpose.xlu0.b32.cont [6/16] 0.0, 128
        %769 = vxpose.xlu0.b32.cont [7/16] 0.0, 128
        %770 = vxpose.xlu0.b32.cont [8/16] 0.0, 128
        %771 = vxpose.xlu0.b32.cont [9/16] 0.0, 128
        %772 = vxpose.xlu0.b32.cont [10/16] 0.0, 128
        %773 = vxpose.xlu0.b32.cont [11/16] 0.0, 128
        %774 = vxpose.xlu0.b32.cont [12/16] 0.0, 128
        %775 = vxpose.xlu0.b32.cont [13/16] 0.0, 128
        %776 = vxpose.xlu0.b32.cont [14/16] 0.0, 128
        %777 = vxpose.xlu0.b32.cont [15/16] 0.0, 128
        %778 = vxpose.xlu0.b32.end [16/16] 0.0, 128
        %v779 = vpop.trf.xlu0
        %v780 = vpop.trf.xlu0
        %v781 = vpop.trf.xlu0
        %v782 = vpop.trf.xlu0
        %v783 = vpop.trf.xlu0
        %v784 = vpop.trf.xlu0
        %v785 = vpop.trf.xlu0
        %v786 = vpop.trf.xlu0
        %v787 = vpop.trf.xlu0
        %v788 = vpop.trf.xlu0
        %v789 = vpop.trf.xlu0
        %v790 = vpop.trf.xlu0
        %v791 = vpop.trf.xlu0
        %v792 = vpop.trf.xlu0
        %v793 = vpop.trf.xlu0
        %v794 = vpop.trf.xlu0
        %795 = vxpose.xlu0.b32.start [1/16] %v715, 128
        %796 = vxpose.xlu0.b32.cont [2/16] 0.0, 128
        %797 = vxpose.xlu0.b32.cont [3/16] 0.0, 128
        %798 = vxpose.xlu0.b32.cont [4/16] 0.0, 128
        %799 = vxpose.xlu0.b32.cont [5/16] 0.0, 128
        %800 = vxpose.xlu0.b32.cont [6/16] 0.0, 128
        %801 = vxpose.xlu0.b32.cont [7/16] 0.0, 128
        %802 = vxpose.xlu0.b32.cont [8/16] 0.0, 128
        %803 = vxpose.xlu0.b32.cont [9/16] 0.0, 128
        %804 = vxpose.xlu0.b32.cont [10/16] 0.0, 128
        %805 = vxpose.xlu0.b32.cont [11/16] 0.0, 128
        %806 = vxpose.xlu0.b32.cont [12/16] 0.0, 128
        %807 = vxpose.xlu0.b32.cont [13/16] 0.0, 128
        %808 = vxpose.xlu0.b32.cont [14/16] 0.0, 128
        %809 = vxpose.xlu0.b32.cont [15/16] 0.0, 128
        %810 = vxpose.xlu0.b32.end [16/16] 0.0, 128
        %v811 = vpop.trf.xlu0
        %v812 = vpop.trf.xlu0
        %v813 = vpop.trf.xlu0
        %v814 = vpop.trf.xlu0
        %v815 = vpop.trf.xlu0
        %v816 = vpop.trf.xlu0
        %v817 = vpop.trf.xlu0
        %v818 = vpop.trf.xlu0
        %v819 = vpop.trf.xlu0
        %v820 = vpop.trf.xlu0
        %v821 = vpop.trf.xlu0
        %v822 = vpop.trf.xlu0
        %v823 = vpop.trf.xlu0
        %v824 = vpop.trf.xlu0
        %v825 = vpop.trf.xlu0
        %v826 = vpop.trf.xlu0
        %827 = vxpose.xlu0.b32.start [1/16] %v718, 128
        %828 = vxpose.xlu0.b32.cont [2/16] 0.0, 128
        %829 = vxpose.xlu0.b32.cont [3/16] 0.0, 128
        %830 = vxpose.xlu0.b32.cont [4/16] 0.0, 128
        %831 = vxpose.xlu0.b32.cont [5/16] 0.0, 128
        %832 = vxpose.xlu0.b32.cont [6/16] 0.0, 128
        %833 = vxpose.xlu0.b32.cont [7/16] 0.0, 128
        %834 = vxpose.xlu0.b32.cont [8/16] 0.0, 128
        %835 = vxpose.xlu0.b32.cont [9/16] 0.0, 128
        %836 = vxpose.xlu0.b32.cont [10/16] 0.0, 128
        %837 = vxpose.xlu0.b32.cont [11/16] 0.0, 128
        %838 = vxpose.xlu0.b32.cont [12/16] 0.0, 128
        %839 = vxpose.xlu0.b32.cont [13/16] 0.0, 128
        %840 = vxpose.xlu0.b32.cont [14/16] 0.0, 128
        %841 = vxpose.xlu0.b32.cont [15/16] 0.0, 128
        %842 = vxpose.xlu0.b32.end [16/16] 0.0, 128
        %v843 = vpop.trf.xlu0
        %v844 = vpop.trf.xlu0
        %v845 = vpop.trf.xlu0
        %v846 = vpop.trf.xlu0
        %v847 = vpop.trf.xlu0
        %v848 = vpop.trf.xlu0
        %v849 = vpop.trf.xlu0
        %v850 = vpop.trf.xlu0
        %v851 = vpop.trf.xlu0
        %v852 = vpop.trf.xlu0
        %v853 = vpop.trf.xlu0
        %v854 = vpop.trf.xlu0
        %v855 = vpop.trf.xlu0
        %v856 = vpop.trf.xlu0
        %v857 = vpop.trf.xlu0
        %v858 = vpop.trf.xlu0
        %vm859 = vcmask 64512
        %v860 = vsel %vm859, %v701, 0
        %862 = vmatpush.msra.mxu0 0.0
        %863 = vmatpush.msra.mxu0 0.0
        %864 = vmatpush.msra.mxu0 0.0
        %865 = vmatpush.msra.mxu0 0.0
        %866 = vmatpush.msra.mxu0 0.0
        %867 = vmatpush.msra.mxu0 0.0
        %868 = vmatpush.msra.mxu0 0.0
        %869 = vmatpush.msra.mxu0 0.0
        %870 = vmatpush.msra.mxu0 0.0
        %871 = vmatpush.msra.mxu0 0.0
        %872 = vmatpush.msra.mxu0 0.0
        %873 = vmatpush.msra.mxu0 0.0
        %874 = vmatpush.msra.mxu0 0.0
        %875 = vmatpush.msra.mxu0 0.0
        %876 = vmatpush.msra.mxu0 0.0
        %877 = vmatpush.msra.mxu0 %v747
        %878 = vmatmul.f32.gmra.mxu0 %v860
        %v879 = vpop.f32.mrf.mxu0
        %v880 = vadd.f32 0.0, %v879
        %881 = vdwg.mxu0
        %v882 = vsel %vm859, %v704, 0
        %884 = vmatpush.msra.mxu0 0.0
        %885 = vmatpush.msra.mxu0 0.0
        %886 = vmatpush.msra.mxu0 0.0
        %887 = vmatpush.msra.mxu0 0.0
        %888 = vmatpush.msra.mxu0 0.0
        %889 = vmatpush.msra.mxu0 0.0
        %890 = vmatpush.msra.mxu0 0.0
        %891 = vmatpush.msra.mxu0 0.0
        %892 = vmatpush.msra.mxu0 0.0
        %893 = vmatpush.msra.mxu0 0.0
        %894 = vmatpush.msra.mxu0 0.0
        %895 = vmatpush.msra.mxu0 0.0
        %896 = vmatpush.msra.mxu0 0.0
        %897 = vmatpush.msra.mxu0 0.0
        %898 = vmatpush.msra.mxu0 0.0
        %899 = vmatpush.msra.mxu0 %v779
        %900 = vmatmul.f32.gmra.mxu0 %v882
        %v901 = vpop.f32.mrf.mxu0
        %v902 = vadd.f32 0.0, %v901
        %903 = vdwg.mxu0
        %v904 = vsel %vm859, %v706, 0
        %906 = vmatpush.msra.mxu0 0.0
        %907 = vmatpush.msra.mxu0 0.0
        %908 = vmatpush.msra.mxu0 0.0
        %909 = vmatpush.msra.mxu0 0.0
        %910 = vmatpush.msra.mxu0 0.0
        %911 = vmatpush.msra.mxu0 0.0
        %912 = vmatpush.msra.mxu0 0.0
        %913 = vmatpush.msra.mxu0 0.0
        %914 = vmatpush.msra.mxu0 0.0
        %915 = vmatpush.msra.mxu0 0.0
        %916 = vmatpush.msra.mxu0 0.0
        %917 = vmatpush.msra.mxu0 0.0
        %918 = vmatpush.msra.mxu0 0.0
        %919 = vmatpush.msra.mxu0 0.0
        %920 = vmatpush.msra.mxu0 0.0
        %921 = vmatpush.msra.mxu0 %v811
        %922 = vmatmul.f32.gmra.mxu0 %v904
        %v923 = vpop.f32.mrf.mxu0
        %v924 = vadd.f32 0.0, %v923
        %925 = vdwg.mxu0
        %v926 = vsel %vm859, %v708, 0
        %928 = vmatpush.msra.mxu0 0.0
        %929 = vmatpush.msra.mxu0 0.0
        %930 = vmatpush.msra.mxu0 0.0
        %931 = vmatpush.msra.mxu0 0.0
        %932 = vmatpush.msra.mxu0 0.0
        %933 = vmatpush.msra.mxu0 0.0
        %934 = vmatpush.msra.mxu0 0.0
        %935 = vmatpush.msra.mxu0 0.0
        %936 = vmatpush.msra.mxu0 0.0
        %937 = vmatpush.msra.mxu0 0.0
        %938 = vmatpush.msra.mxu0 0.0
        %939 = vmatpush.msra.mxu0 0.0
        %940 = vmatpush.msra.mxu0 0.0
        %941 = vmatpush.msra.mxu0 0.0
        %942 = vmatpush.msra.mxu0 0.0
        %943 = vmatpush.msra.mxu0 %v843
        %944 = vmatmul.f32.gmra.mxu0 %v926
        %v945 = vpop.f32.mrf.mxu0
        %v946 = vadd.f32 0.0, %v945
        %947 = vdwg.mxu0
        %v948 = vsel %vm859, %v880, -inf
        %949 = vmax.xlane.f32.xlu0 %v948
        %v950 = vpop.xlane.xlu0 %949
        %v951 = vsel %vm859, %v902, -inf
        %952 = vmax.xlane.f32.xlu0 %v951
        %v953 = vpop.xlane.xlu0 %952
        %v954 = vsel %vm859, %v924, -inf
        %955 = vmax.xlane.f32.xlu0 %v954
        %v956 = vpop.xlane.xlu0 %955
        %v957 = vsel %vm859, %v946, -inf
        %958 = vmax.xlane.f32.xlu0 %v957
        %v959 = vpop.xlane.xlu0 %958
        %v960 = vsub.f32 %v880, %v950
        %v961 = vsub.f32 %v902, %v953
        %v962 = vsub.f32 %v924, %v956
        %v963 = vsub.f32 %v946, %v959
        %v964 = vmul.f32 %v960, 1.442695
        %v965 = vpow.pop %v964
        %v966 = vmul.f32 %v961, 1.442695
        %v967 = vpow.pop %v966
        %v968 = vmul.f32 %v962, 1.442695
        %v969 = vpow.pop %v968
        %v970 = vmul.f32 %v963, 1.442695
        %v971 = vpow.pop %v970
        %v972 = vsel %vm859, %v965, 0.0
        %973 = vadd.xlane.f32.xlu0 %v972
        %v974 = vpop.xlane.xlu0 %973
        %v975 = vsel %vm859, %v967, 0.0
        %976 = vadd.xlane.f32.xlu0 %v975
        %v977 = vpop.xlane.xlu0 %976
        %v978 = vsel %vm859, %v969, 0.0
        %979 = vadd.xlane.f32.xlu0 %v978
        %v980 = vpop.xlane.xlu0 %979
        %v981 = vsel %vm859, %v971, 0.0
        %982 = vadd.xlane.f32.xlu0 %v981
        %v983 = vpop.xlane.xlu0 %982
        %v984 = vrcp.pop %v974
        %v985 = vmul.f32 %v974, %v984
        %v986 = vsub.f32 1.0, %v985
        %v987 = vmul.f32 %v984, %v986
        %v988 = vadd.f32 %v984, %v987
        %vm989 = vweird.f32 %v974
        %vm990 = vweird.f32 %v984
        %vm991 = vmor %vm989, %vm990
        %v992 = vsel %vm991, %v984, %v988
        %v993 = vand.u32 2147483647, %v974
        %vm994 = vcmp.eq.f32.partialorder %v993, 8.507059e+37
        %v995 = vand.u32 %v974, 2147483648
        %v996 = vor.u32 1.1754944e-38, %v995
        %v997 = vsel %vm994, %v996, %v992
        %v998 = vmul.f32 1.0, %v997
        %v999 = vrcp.pop %v977
        %v1000 = vmul.f32 %v977, %v999
        %v1001 = vsub.f32 1.0, %v1000
        %v1002 = vmul.f32 %v999, %v1001
        %v1003 = vadd.f32 %v999, %v1002
        %vm1004 = vweird.f32 %v977
        %vm1005 = vweird.f32 %v999
        %vm1006 = vmor %vm1004, %vm1005
        %v1007 = vsel %vm1006, %v999, %v1003
        %v1008 = vand.u32 2147483647, %v977
        %vm1009 = vcmp.eq.f32.partialorder %v1008, 8.507059e+37
        %v1010 = vand.u32 %v977, 2147483648
        %v1011 = vor.u32 1.1754944e-38, %v1010
        %v1012 = vsel %vm1009, %v1011, %v1007
        %v1013 = vmul.f32 1.0, %v1012
        %v1014 = vrcp.pop %v980
        %v1015 = vmul.f32 %v980, %v1014
        %v1016 = vsub.f32 1.0, %v1015
        %v1017 = vmul.f32 %v1014, %v1016
        %v1018 = vadd.f32 %v1014, %v1017
        %vm1019 = vweird.f32 %v980
        %vm1020 = vweird.f32 %v1014
        %vm1021 = vmor %vm1019, %vm1020
        %v1022 = vsel %vm1021, %v1014, %v1018
        %v1023 = vand.u32 2147483647, %v980
        %vm1024 = vcmp.eq.f32.partialorder %v1023, 8.507059e+37
        %v1025 = vand.u32 %v980, 2147483648
        %v1026 = vor.u32 1.1754944e-38, %v1025
        %v1027 = vsel %vm1024, %v1026, %v1022
        %v1028 = vmul.f32 1.0, %v1027
        %v1029 = vrcp.pop %v983
        %v1030 = vmul.f32 %v983, %v1029
        %v1031 = vsub.f32 1.0, %v1030
        %v1032 = vmul.f32 %v1029, %v1031
        %v1033 = vadd.f32 %v1029, %v1032
        %vm1034 = vweird.f32 %v983
        %vm1035 = vweird.f32 %v1029
        %vm1036 = vmor %vm1034, %vm1035
        %v1037 = vsel %vm1036, %v1029, %v1033
        %v1038 = vand.u32 2147483647, %v983
        %vm1039 = vcmp.eq.f32.partialorder %v1038, 8.507059e+37
        %v1040 = vand.u32 %v983, 2147483648
        %v1041 = vor.u32 1.1754944e-38, %v1040
        %v1042 = vsel %vm1039, %v1041, %v1037
        %v1043 = vmul.f32 1.0, %v1042
        %v1044 = vmul.f32 %v965, %v998
        %v1045 = vmul.f32 %v967, %v1013
        %v1046 = vmul.f32 %v969, %v1028
        %v1047 = vmul.f32 %v971, %v1043
        %1048 = vst.msk [vmem:[%s601] sm:$0xff] %vm859, %v1044
        %1049 = vst.msk [vmem:[%s601 + $0x8] sm:$0xff] %vm859, %v1045
        %1050 = vst.msk [vmem:[%s601 + $0x10] sm:$0xff] %vm859, %v1046
        %1051 = vst.msk [vmem:[%s601 + $0x18] sm:$0xff] %vm859, %v1047
        %1052 = vxpose.xlu0.b32.start [1/16] %v720, 128
        %1053 = vxpose.xlu0.b32.cont [2/16] 0.0, 128
        %1054 = vxpose.xlu0.b32.cont [3/16] 0.0, 128
        %1055 = vxpose.xlu0.b32.cont [4/16] 0.0, 128
        %1056 = vxpose.xlu0.b32.cont [5/16] 0.0, 128
        %1057 = vxpose.xlu0.b32.cont [6/16] 0.0, 128
        %1058 = vxpose.xlu0.b32.cont [7/16] 0.0, 128
        %1059 = vxpose.xlu0.b32.cont [8/16] 0.0, 128
        %1060 = vxpose.xlu0.b32.cont [9/16] 0.0, 128
        %1061 = vxpose.xlu0.b32.cont [10/16] 0.0, 128
        %1062 = vxpose.xlu0.b32.cont [11/16] 0.0, 128
        %1063 = vxpose.xlu0.b32.cont [12/16] 0.0, 128
        %1064 = vxpose.xlu0.b32.cont [13/16] 0.0, 128
        %1065 = vxpose.xlu0.b32.cont [14/16] 0.0, 128
        %1066 = vxpose.xlu0.b32.cont [15/16] 0.0, 128
        %1067 = vxpose.xlu0.b32.end [16/16] 0.0, 128
        %v1068 = vpop.trf.xlu0
        %v1069 = vpop.trf.xlu0
        %v1070 = vpop.trf.xlu0
        %v1071 = vpop.trf.xlu0
        %v1072 = vpop.trf.xlu0
        %v1073 = vpop.trf.xlu0
        %v1074 = vpop.trf.xlu0
        %v1075 = vpop.trf.xlu0
        %v1076 = vpop.trf.xlu0
        %v1077 = vpop.trf.xlu0
        %v1078 = vpop.trf.xlu0
        %v1079 = vpop.trf.xlu0
        %v1080 = vpop.trf.xlu0
        %v1081 = vpop.trf.xlu0
        %v1082 = vpop.trf.xlu0
        %v1083 = vpop.trf.xlu0
        %1084 = vxpose.xlu0.b32.start [1/16] %v723, 128
        %1085 = vxpose.xlu0.b32.cont [2/16] 0.0, 128
        %1086 = vxpose.xlu0.b32.cont [3/16] 0.0, 128
        %1087 = vxpose.xlu0.b32.cont [4/16] 0.0, 128
        %1088 = vxpose.xlu0.b32.cont [5/16] 0.0, 128
        %1089 = vxpose.xlu0.b32.cont [6/16] 0.0, 128
        %1090 = vxpose.xlu0.b32.cont [7/16] 0.0, 128
        %1091 = vxpose.xlu0.b32.cont [8/16] 0.0, 128
        %1092 = vxpose.xlu0.b32.cont [9/16] 0.0, 128
        %1093 = vxpose.xlu0.b32.cont [10/16] 0.0, 128
        %1094 = vxpose.xlu0.b32.cont [11/16] 0.0, 128
        %1095 = vxpose.xlu0.b32.cont [12/16] 0.0, 128
        %1096 = vxpose.xlu0.b32.cont [13/16] 0.0, 128
        %1097 = vxpose.xlu0.b32.cont [14/16] 0.0, 128
        %1098 = vxpose.xlu0.b32.cont [15/16] 0.0, 128
        %1099 = vxpose.xlu0.b32.end [16/16] 0.0, 128
        %v1100 = vpop.trf.xlu0
        %v1101 = vpop.trf.xlu0
        %v1102 = vpop.trf.xlu0
        %v1103 = vpop.trf.xlu0
        %v1104 = vpop.trf.xlu0
        %v1105 = vpop.trf.xlu0
        %v1106 = vpop.trf.xlu0
        %v1107 = vpop.trf.xlu0
        %v1108 = vpop.trf.xlu0
        %v1109 = vpop.trf.xlu0
        %v1110 = vpop.trf.xlu0
        %v1111 = vpop.trf.xlu0
        %v1112 = vpop.trf.xlu0
        %v1113 = vpop.trf.xlu0
        %v1114 = vpop.trf.xlu0
        %v1115 = vpop.trf.xlu0
        %1116 = vxpose.xlu0.b32.start [1/16] %v726, 128
        %1117 = vxpose.xlu0.b32.cont [2/16] 0.0, 128
        %1118 = vxpose.xlu0.b32.cont [3/16] 0.0, 128
        %1119 = vxpose.xlu0.b32.cont [4/16] 0.0, 128
        %1120 = vxpose.xlu0.b32.cont [5/16] 0.0, 128
        %1121 = vxpose.xlu0.b32.cont [6/16] 0.0, 128
        %1122 = vxpose.xlu0.b32.cont [7/16] 0.0, 128
        %1123 = vxpose.xlu0.b32.cont [8/16] 0.0, 128
        %1124 = vxpose.xlu0.b32.cont [9/16] 0.0, 128
        %1125 = vxpose.xlu0.b32.cont [10/16] 0.0, 128
        %1126 = vxpose.xlu0.b32.cont [11/16] 0.0, 128
        %1127 = vxpose.xlu0.b32.cont [12/16] 0.0, 128
        %1128 = vxpose.xlu0.b32.cont [13/16] 0.0, 128
        %1129 = vxpose.xlu0.b32.cont [14/16] 0.0, 128
        %1130 = vxpose.xlu0.b32.cont [15/16] 0.0, 128
        %1131 = vxpose.xlu0.b32.end [16/16] 0.0, 128
        %v1132 = vpop.trf.xlu0
        %v1133 = vpop.trf.xlu0
        %v1134 = vpop.trf.xlu0
        %v1135 = vpop.trf.xlu0
        %v1136 = vpop.trf.xlu0
        %v1137 = vpop.trf.xlu0
        %v1138 = vpop.trf.xlu0
        %v1139 = vpop.trf.xlu0
        %v1140 = vpop.trf.xlu0
        %v1141 = vpop.trf.xlu0
        %v1142 = vpop.trf.xlu0
        %v1143 = vpop.trf.xlu0
        %v1144 = vpop.trf.xlu0
        %v1145 = vpop.trf.xlu0
        %v1146 = vpop.trf.xlu0
        %v1147 = vpop.trf.xlu0
        %1148 = vxpose.xlu0.b32.start [1/16] %v729, 128
        %1149 = vxpose.xlu0.b32.cont [2/16] 0.0, 128
        %1150 = vxpose.xlu0.b32.cont [3/16] 0.0, 128
        %1151 = vxpose.xlu0.b32.cont [4/16] 0.0, 128
        %1152 = vxpose.xlu0.b32.cont [5/16] 0.0, 128
        %1153 = vxpose.xlu0.b32.cont [6/16] 0.0, 128
        %1154 = vxpose.xlu0.b32.cont [7/16] 0.0, 128
        %1155 = vxpose.xlu0.b32.cont [8/16] 0.0, 128
        %1156 = vxpose.xlu0.b32.cont [9/16] 0.0, 128
        %1157 = vxpose.xlu0.b32.cont [10/16] 0.0, 128
        %1158 = vxpose.xlu0.b32.cont [11/16] 0.0, 128
        %1159 = vxpose.xlu0.b32.cont [12/16] 0.0, 128
        %1160 = vxpose.xlu0.b32.cont [13/16] 0.0, 128
        %1161 = vxpose.xlu0.b32.cont [14/16] 0.0, 128
        %1162 = vxpose.xlu0.b32.cont [15/16] 0.0, 128
        %1163 = vxpose.xlu0.b32.end [16/16] 0.0, 128
        %v1164 = vpop.trf.xlu0
        %v1165 = vpop.trf.xlu0
        %v1166 = vpop.trf.xlu0
        %v1167 = vpop.trf.xlu0
        %v1168 = vpop.trf.xlu0
        %v1169 = vpop.trf.xlu0
        %v1170 = vpop.trf.xlu0
        %v1171 = vpop.trf.xlu0
        %v1172 = vpop.trf.xlu0
        %v1173 = vpop.trf.xlu0
        %v1174 = vpop.trf.xlu0
        %v1175 = vpop.trf.xlu0
        %v1176 = vpop.trf.xlu0
        %v1177 = vpop.trf.xlu0
        %v1178 = vpop.trf.xlu0
        %v1179 = vpop.trf.xlu0
        %v1181 = vsel %vm859, %v1068, 0
        %v1184 = vsel %vm859, %v1044, 0
        %1186 = vmatpush.xpose.msra.mxu0 0.0
        %1187 = vmatpush.xpose.msra.mxu0 0.0
        %1188 = vmatpush.xpose.msra.mxu0 0.0
        %1189 = vmatpush.xpose.msra.mxu0 0.0
        %1190 = vmatpush.xpose.msra.mxu0 0.0
        %1191 = vmatpush.xpose.msra.mxu0 0.0
        %1192 = vmatpush.xpose.msra.mxu0 0.0
        %1193 = vmatpush.xpose.msra.mxu0 0.0
        %1194 = vmatpush.xpose.msra.mxu0 0.0
        %1195 = vmatpush.xpose.msra.mxu0 0.0
        %1196 = vmatpush.xpose.msra.mxu0 0.0
        %1197 = vmatpush.xpose.msra.mxu0 0.0
        %1198 = vmatpush.xpose.msra.mxu0 0.0
        %1199 = vmatpush.xpose.msra.mxu0 0.0
        %1200 = vmatpush.xpose.msra.mxu0 0.0
        %1201 = vmatpush.xpose.msra.mxu0 %v1184
        %1202 = vmatmul.f32.gmra.mxu0 %v1181
        %v1203 = vpop.f32.mrf.mxu0
        %v1204 = vadd.f32 0.0, %v1203
        %1205 = vdwg.mxu0
        %v1207 = vsel %vm859, %v1100, 0
        %v1210 = vsel %vm859, %v1045, 0
        %1212 = vmatpush.xpose.msra.mxu0 0.0
        %1213 = vmatpush.xpose.msra.mxu0 0.0
        %1214 = vmatpush.xpose.msra.mxu0 0.0
        %1215 = vmatpush.xpose.msra.mxu0 0.0
        %1216 = vmatpush.xpose.msra.mxu0 0.0
        %1217 = vmatpush.xpose.msra.mxu0 0.0
        %1218 = vmatpush.xpose.msra.mxu0 0.0
        %1219 = vmatpush.xpose.msra.mxu0 0.0
        %1220 = vmatpush.xpose.msra.mxu0 0.0
        %1221 = vmatpush.xpose.msra.mxu0 0.0
        %1222 = vmatpush.xpose.msra.mxu0 0.0
        %1223 = vmatpush.xpose.msra.mxu0 0.0
        %1224 = vmatpush.xpose.msra.mxu0 0.0
        %1225 = vmatpush.xpose.msra.mxu0 0.0
        %1226 = vmatpush.xpose.msra.mxu0 0.0
        %1227 = vmatpush.xpose.msra.mxu0 %v1210
        %1228 = vmatmul.f32.gmra.mxu0 %v1207
        %v1229 = vpop.f32.mrf.mxu0
        %v1230 = vadd.f32 0.0, %v1229
        %1231 = vdwg.mxu0
        %v1233 = vsel %vm859, %v1132, 0
        %v1236 = vsel %vm859, %v1046, 0
        %1238 = vmatpush.xpose.msra.mxu0 0.0
        %1239 = vmatpush.xpose.msra.mxu0 0.0
        %1240 = vmatpush.xpose.msra.mxu0 0.0
        %1241 = vmatpush.xpose.msra.mxu0 0.0
        %1242 = vmatpush.xpose.msra.mxu0 0.0
        %1243 = vmatpush.xpose.msra.mxu0 0.0
        %1244 = vmatpush.xpose.msra.mxu0 0.0
        %1245 = vmatpush.xpose.msra.mxu0 0.0
        %1246 = vmatpush.xpose.msra.mxu0 0.0
        %1247 = vmatpush.xpose.msra.mxu0 0.0
        %1248 = vmatpush.xpose.msra.mxu0 0.0
        %1249 = vmatpush.xpose.msra.mxu0 0.0
        %1250 = vmatpush.xpose.msra.mxu0 0.0
        %1251 = vmatpush.xpose.msra.mxu0 0.0
        %1252 = vmatpush.xpose.msra.mxu0 0.0
        %1253 = vmatpush.xpose.msra.mxu0 %v1236
        %1254 = vmatmul.f32.gmra.mxu0 %v1233
        %v1255 = vpop.f32.mrf.mxu0
        %v1256 = vadd.f32 0.0, %v1255
        %1257 = vdwg.mxu0
        %v1259 = vsel %vm859, %v1164, 0
        %v1262 = vsel %vm859, %v1047, 0
        %1264 = vmatpush.xpose.msra.mxu0 0.0
        %1265 = vmatpush.xpose.msra.mxu0 0.0
        %1266 = vmatpush.xpose.msra.mxu0 0.0
        %1267 = vmatpush.xpose.msra.mxu0 0.0
        %1268 = vmatpush.xpose.msra.mxu0 0.0
        %1269 = vmatpush.xpose.msra.mxu0 0.0
        %1270 = vmatpush.xpose.msra.mxu0 0.0
        %1271 = vmatpush.xpose.msra.mxu0 0.0
        %1272 = vmatpush.xpose.msra.mxu0 0.0
        %1273 = vmatpush.xpose.msra.mxu0 0.0
        %1274 = vmatpush.xpose.msra.mxu0 0.0
        %1275 = vmatpush.xpose.msra.mxu0 0.0
        %1276 = vmatpush.xpose.msra.mxu0 0.0
        %1277 = vmatpush.xpose.msra.mxu0 0.0
        %1278 = vmatpush.xpose.msra.mxu0 0.0
        %1279 = vmatpush.xpose.msra.mxu0 %v1262
        %1280 = vmatmul.f32.gmra.mxu0 %v1259
        %v1281 = vpop.f32.mrf.mxu0
        %v1282 = vadd.f32 0.0, %v1281
        %1283 = vdwg.mxu0
        %1284 = vxpose.xlu0.b32.start [1/16] %v1204, 128
        %1285 = vxpose.xlu0.b32.cont [2/16] 0.0, 128
        %1286 = vxpose.xlu0.b32.cont [3/16] 0.0, 128
        %1287 = vxpose.xlu0.b32.cont [4/16] 0.0, 128
        %1288 = vxpose.xlu0.b32.cont [5/16] 0.0, 128
        %1289 = vxpose.xlu0.b32.cont [6/16] 0.0, 128
        %1290 = vxpose.xlu0.b32.cont [7/16] 0.0, 128
        %1291 = vxpose.xlu0.b32.cont [8/16] 0.0, 128
        %1292 = vxpose.xlu0.b32.cont [9/16] 0.0, 128
        %1293 = vxpose.xlu0.b32.cont [10/16] 0.0, 128
        %1294 = vxpose.xlu0.b32.cont [11/16] 0.0, 128
        %1295 = vxpose.xlu0.b32.cont [12/16] 0.0, 128
        %1296 = vxpose.xlu0.b32.cont [13/16] 0.0, 128
        %1297 = vxpose.xlu0.b32.cont [14/16] 0.0, 128
        %1298 = vxpose.xlu0.b32.cont [15/16] 0.0, 128
        %1299 = vxpose.xlu0.b32.end [16/16] 0.0, 128
        %v1300 = vpop.trf.xlu0
        %v1301 = vpop.trf.xlu0
        %v1302 = vpop.trf.xlu0
        %v1303 = vpop.trf.xlu0
        %v1304 = vpop.trf.xlu0
        %v1305 = vpop.trf.xlu0
        %v1306 = vpop.trf.xlu0
        %v1307 = vpop.trf.xlu0
        %v1308 = vpop.trf.xlu0
        %v1309 = vpop.trf.xlu0
        %v1310 = vpop.trf.xlu0
        %v1311 = vpop.trf.xlu0
        %v1312 = vpop.trf.xlu0
        %v1313 = vpop.trf.xlu0
        %v1314 = vpop.trf.xlu0
        %v1315 = vpop.trf.xlu0
        %1316 = vxpose.xlu0.b32.start [1/16] %v1230, 128
        %1317 = vxpose.xlu0.b32.cont [2/16] 0.0, 128
        %1318 = vxpose.xlu0.b32.cont [3/16] 0.0, 128
        %1319 = vxpose.xlu0.b32.cont [4/16] 0.0, 128
        %1320 = vxpose.xlu0.b32.cont [5/16] 0.0, 128
        %1321 = vxpose.xlu0.b32.cont [6/16] 0.0, 128
        %1322 = vxpose.xlu0.b32.cont [7/16] 0.0, 128
        %1323 = vxpose.xlu0.b32.cont [8/16] 0.0, 128
        %1324 = vxpose.xlu0.b32.cont [9/16] 0.0, 128
        %1325 = vxpose.xlu0.b32.cont [10/16] 0.0, 128
        %1326 = vxpose.xlu0.b32.cont [11/16] 0.0, 128
        %1327 = vxpose.xlu0.b32.cont [12/16] 0.0, 128
        %1328 = vxpose.xlu0.b32.cont [13/16] 0.0, 128
        %1329 = vxpose.xlu0.b32.cont [14/16] 0.0, 128
        %1330 = vxpose.xlu0.b32.cont [15/16] 0.0, 128
        %1331 = vxpose.xlu0.b32.end [16/16] 0.0, 128
        %v1332 = vpop.trf.xlu0
        %v1333 = vpop.trf.xlu0
        %v1334 = vpop.trf.xlu0
        %v1335 = vpop.trf.xlu0
        %v1336 = vpop.trf.xlu0
        %v1337 = vpop.trf.xlu0
        %v1338 = vpop.trf.xlu0
        %v1339 = vpop.trf.xlu0
        %v1340 = vpop.trf.xlu0
        %v1341 = vpop.trf.xlu0
        %v1342 = vpop.trf.xlu0
        %v1343 = vpop.trf.xlu0
        %v1344 = vpop.trf.xlu0
        %v1345 = vpop.trf.xlu0
        %v1346 = vpop.trf.xlu0
        %v1347 = vpop.trf.xlu0
        %1348 = vxpose.xlu0.b32.start [1/16] %v1256, 128
        %1349 = vxpose.xlu0.b32.cont [2/16] 0.0, 128
        %1350 = vxpose.xlu0.b32.cont [3/16] 0.0, 128
        %1351 = vxpose.xlu0.b32.cont [4/16] 0.0, 128
        %1352 = vxpose.xlu0.b32.cont [5/16] 0.0, 128
        %1353 = vxpose.xlu0.b32.cont [6/16] 0.0, 128
        %1354 = vxpose.xlu0.b32.cont [7/16] 0.0, 128
        %1355 = vxpose.xlu0.b32.cont [8/16] 0.0, 128
        %1356 = vxpose.xlu0.b32.cont [9/16] 0.0, 128
        %1357 = vxpose.xlu0.b32.cont [10/16] 0.0, 128
        %1358 = vxpose.xlu0.b32.cont [11/16] 0.0, 128
        %1359 = vxpose.xlu0.b32.cont [12/16] 0.0, 128
        %1360 = vxpose.xlu0.b32.cont [13/16] 0.0, 128
        %1361 = vxpose.xlu0.b32.cont [14/16] 0.0, 128
        %1362 = vxpose.xlu0.b32.cont [15/16] 0.0, 128
        %1363 = vxpose.xlu0.b32.end [16/16] 0.0, 128
        %v1364 = vpop.trf.xlu0
        %v1365 = vpop.trf.xlu0
        %v1366 = vpop.trf.xlu0
        %v1367 = vpop.trf.xlu0
        %v1368 = vpop.trf.xlu0
        %v1369 = vpop.trf.xlu0
        %v1370 = vpop.trf.xlu0
        %v1371 = vpop.trf.xlu0
        %v1372 = vpop.trf.xlu0
        %v1373 = vpop.trf.xlu0
        %v1374 = vpop.trf.xlu0
        %v1375 = vpop.trf.xlu0
        %v1376 = vpop.trf.xlu0
        %v1377 = vpop.trf.xlu0
        %v1378 = vpop.trf.xlu0
        %v1379 = vpop.trf.xlu0
        %1380 = vxpose.xlu0.b32.start [1/16] %v1282, 128
        %1381 = vxpose.xlu0.b32.cont [2/16] 0.0, 128
        %1382 = vxpose.xlu0.b32.cont [3/16] 0.0, 128
        %1383 = vxpose.xlu0.b32.cont [4/16] 0.0, 128
        %1384 = vxpose.xlu0.b32.cont [5/16] 0.0, 128
        %1385 = vxpose.xlu0.b32.cont [6/16] 0.0, 128
        %1386 = vxpose.xlu0.b32.cont [7/16] 0.0, 128
        %1387 = vxpose.xlu0.b32.cont [8/16] 0.0, 128
        %1388 = vxpose.xlu0.b32.cont [9/16] 0.0, 128
        %1389 = vxpose.xlu0.b32.cont [10/16] 0.0, 128
        %1390 = vxpose.xlu0.b32.cont [11/16] 0.0, 128
        %1391 = vxpose.xlu0.b32.cont [12/16] 0.0, 128
        %1392 = vxpose.xlu0.b32.cont [13/16] 0.0, 128
        %1393 = vxpose.xlu0.b32.cont [14/16] 0.0, 128
        %1394 = vxpose.xlu0.b32.cont [15/16] 0.0, 128
        %1395 = vxpose.xlu0.b32.end [16/16] 0.0, 128
        %v1396 = vpop.trf.xlu0
        %v1397 = vpop.trf.xlu0
        %v1398 = vpop.trf.xlu0
        %v1399 = vpop.trf.xlu0
        %v1400 = vpop.trf.xlu0
        %v1401 = vpop.trf.xlu0
        %v1402 = vpop.trf.xlu0
        %v1403 = vpop.trf.xlu0
        %v1404 = vpop.trf.xlu0
        %v1405 = vpop.trf.xlu0
        %v1406 = vpop.trf.xlu0
        %v1407 = vpop.trf.xlu0
        %v1408 = vpop.trf.xlu0
        %v1409 = vpop.trf.xlu0
        %v1410 = vpop.trf.xlu0
        %v1411 = vpop.trf.xlu0
        %v1412 = vrot.slane %v1364, 4
        %vm1413 = vcmask 1047556
        %v1414 = vsel %vm1413, %v1412, %v1300
        %v1415 = vrot.slane %v1300, 4
        %v1416 = vsel %vm1413, %v1364, %v1415
        %v1418 = vunpack.c.l.s4 1983009808
        %v1419 = vunpack.c.0.s8 %v1418
        %v1420 = vperm.slane %v1414, %v1419
        %v1422 = vunpack.c.l.s4 1983009808
        %v1423 = vunpack.c.0.s8 %v1422
        %v1424 = vperm.slane %v1416, %v1423
        %v1425 = vrot.slane %v1396, 4
        %v1426 = vsel %vm1413, %v1425, %v1332
        %v1427 = vrot.slane %v1332, 4
        %v1428 = vsel %vm1413, %v1396, %v1427
        %v1430 = vunpack.c.l.s4 1983009808
        %v1431 = vunpack.c.0.s8 %v1430
        %v1432 = vperm.slane %v1426, %v1431
        %v1434 = vunpack.c.l.s4 1983009808
        %v1435 = vunpack.c.0.s8 %v1434
        %v1436 = vperm.slane %v1428, %v1435
        %v1437 = vrot.slane %v1432, 4
        %v1438 = vsel %vm1413, %v1437, %v1420
        %v1439 = vrot.slane %v1420, 4
        %v1440 = vsel %vm1413, %v1432, %v1439
        %v1442 = vunpack.c.l.s4 1934713408
        %v1443 = vunpack.c.0.s8 %v1442
        %v1444 = vperm.slane %v1438, %v1443
        %v1446 = vunpack.c.l.s4 1934713408
        %v1447 = vunpack.c.0.s8 %v1446
        %v1448 = vperm.slane %v1440, %v1447
        %v1449 = vrot.slane %v1436, 4
        %v1450 = vsel %vm1413, %v1449, %v1424
        %v1451 = vrot.slane %v1424, 4
        %v1452 = vsel %vm1413, %v1436, %v1451
        %v1454 = vunpack.c.l.s4 1934713408
        %v1455 = vunpack.c.0.s8 %v1454
        %v1456 = vperm.slane %v1450, %v1455
        %v1458 = vunpack.c.l.s4 1934713408
        %v1459 = vunpack.c.0.s8 %v1458
        %v1460 = vperm.slane %v1452, %v1459
        %v1461 = vrot.slane %v1444, 4
        %v1462 = vsel %vm1413, 0.0, %v1461
        %v1463 = vrot.slane %v1448, 4
        %v1464 = vsel %vm1413, 0.0, %v1463
        %v1465 = vrot.slane %v1456, 4
        %v1466 = vsel %vm1413, 0.0, %v1465
        %v1467 = vrot.slane %v1460, 4
        %v1468 = vsel %vm1413, 0.0, %v1467
        %v1469 = vsel %vm1413, %v1463, %v1444
        %v1471 = vunpack.c.l.s4 1983009808
        %v1472 = vunpack.c.0.s8 %v1471
        %v1473 = vperm.slane %v1469, %v1472
        %v1474 = vrot.slane %v1464, 4
        %v1475 = vsel %vm1413, %v1474, %v1462
        %v1477 = vunpack.c.l.s4 1983009808
        %v1478 = vunpack.c.0.s8 %v1477
        %v1479 = vperm.slane %v1475, %v1478
        %v1480 = vsel %vm1413, %v1467, %v1456
        %v1482 = vunpack.c.l.s4 1983009808
        %v1483 = vunpack.c.0.s8 %v1482
        %v1484 = vperm.slane %v1480, %v1483
        %v1485 = vrot.slane %v1468, 4
        %v1486 = vsel %vm1413, %v1485, %v1466
        %v1488 = vunpack.c.l.s4 1983009808
        %v1489 = vunpack.c.0.s8 %v1488
        %v1490 = vperm.slane %v1486, %v1489
        %v1491 = vrot.slane %v1479, 4
        %v1492 = vsel %vm1413, %v1491, %v1473
        %v1493 = vrot.slane %v1473, 4
        %v1494 = vsel %vm1413, %v1479, %v1493
        %v1496 = vunpack.c.l.s4 1934713408
        %v1497 = vunpack.c.0.s8 %v1496
        %v1498 = vperm.slane %v1492, %v1497
        %v1500 = vunpack.c.l.s4 1934713408
        %v1501 = vunpack.c.0.s8 %v1500
        %v1502 = vperm.slane %v1494, %v1501
        %v1503 = vrot.slane %v1490, 4
        %v1504 = vsel %vm1413, %v1503, %v1484
        %v1505 = vrot.slane %v1484, 4
        %v1506 = vsel %vm1413, %v1490, %v1505
        %v1508 = vunpack.c.l.s4 1934713408
        %v1509 = vunpack.c.0.s8 %v1508
        %v1510 = vperm.slane %v1504, %v1509
        %v1512 = vunpack.c.l.s4 1934713408
        %v1513 = vunpack.c.0.s8 %v1512
        %v1514 = vperm.slane %v1506, %v1513
        %v1515 = vrot.slane %v1510, 4
        %v1516 = vsel %vm1413, %v1515, %v1498
        %v1517 = vrot.slane %v1498, 4
        %v1518 = vsel %vm1413, %v1510, %v1517
        %v1519 = vrot.slane %v1514, 4
        %v1520 = vsel %vm1413, %v1519, %v1502
        %v1521 = vrot.slane %v1502, 4
        %v1522 = vsel %vm1413, %v1514, %v1521
        %1524 = vrot.lane.b32.xlu0 %v1518, 8
        %v1525 = vpop.permute.xlu0 %1524
        %1528 = vrot.lane.b32.xlu0 %v1520, 16
        %v1529 = vpop.permute.xlu0 %1528
        %1532 = vrot.lane.b32.xlu0 %v1522, 24
        %v1533 = vpop.permute.xlu0 %1532
        %v1535 = vsel %vm859, %v1516, %v1525
        %v1536 = vsel %vm677, %v1535, %v1529
        %vm1537 = vcmask 195584
        %v1538 = vsel %vm1537, %v1536, %v1533
        %v1539 = vld [vmem:[#allocation15] sm:$0xff]
        %v1540 = vld [vmem:[#allocation15 + $0x8] sm:$0xff]
        %v1541 = vld [vmem:[#allocation15 + $0x10] sm:$0xff]
        %v1542 = vld [vmem:[#allocation15 + $0x18] sm:$0xff]
        %v1543 = vld [vmem:[%s10] sm:$0x1]
        %v1545 = vperm.slane %v1543, 0
        %vm1547 = vcmask 261120
        %v1549 = vsel %vm1547, %v1538, 0
        %1551 = vmatpush.msra.mxu0 0.0
        %1552 = vmatpush.msra.mxu0 0.0
        %1553 = vmatpush.msra.mxu0 0.0
        %1554 = vmatpush.msra.mxu0 0.0
        %1555 = vmatpush.msra.mxu0 0.0
        %1556 = vmatpush.msra.mxu0 0.0
        %1557 = vmatpush.msra.mxu0 0.0
        %1558 = vmatpush.msra.mxu0 0.0
        %1559 = vmatpush.msra.mxu0 0.0
        %1560 = vmatpush.msra.mxu0 0.0
        %1561 = vmatpush.msra.mxu0 0.0
        %1562 = vmatpush.msra.mxu0 0.0
        %1563 = vmatpush.msra.mxu0 %v1542
        %1564 = vmatpush.msra.mxu0 %v1541
        %1565 = vmatpush.msra.mxu0 %v1540
        %1566 = vmatpush.msra.mxu0 %v1539
        %1567 = vmatmul.f32.gmra.mxu0 %v1549
        %v1568 = vpop.f32.mrf.mxu0
        %v1569 = vadd.f32 %v1545, %v1568
        %1570 = vdwg.mxu0
        %1571 = vst.msk [vmem:[%s594] sm:$0xff] %vm1547, %v1569
        %s1572 = sand.u32 %s308, 1
        %s1573 = scalar_lea.sflag [#allocation6], %s1572
        %s1574 = sand.u32 %s308, 1
        %s1575 = smul.addr %s1574, 8
        %s1576 = scalar_lea.vmem [#allocation16], %s1575
        %s1577 = sand.u32 %s336, 1
        %s1578 = scalar_lea.sflag [#allocation18], %s1577
        %s1579 = sand.u32 %s336, 1
        %s1580 = smul.addr %s1579, 32
        %s1581 = scalar_lea.vmem [#allocation17], %s1580
        // Predicated region
        $region97: #{tpu_custom_call.1} parent=63 // pred_check
          %p1582 = pneg %p318
        $region98: #{tpu_custom_call.1} parent=63 // pred_check_branch
          %1584 = sbr.rel (%p1582) target = $region100
        $region99: #{tpu_custom_call.1} parent=63 // pred_region
          %1586 = vsyncadd %s1573, 0
          %s1587 = sadd.s32 %s43, %s42
          %s1588 = smul.addr %s1587, 8
          %s1589 = scalar_lea.hbm %s11, %s1588
          %s1591 = sshll.u32 %s1576, 4
          %s1592 = int_to_ptr.vmem [resolvable:$true] %s1591
          %s1593 = sshll.u32 %s1589, 4
          %s1594 = int_to_ptr.hbm [resolvable:$true] %s1593
          %1596 = dma.vmem_to_hbm [thread:$0]  %s1592, 128, %s1594, %s1573
        $region100: #{tpu_custom_call.1} parent=63 // pred_fallthru
          _
        // Predicated region
        $region101: #{tpu_custom_call.1} parent=63 // pred_check
          %p1597 = pneg %p346
        $region102: #{tpu_custom_call.1} parent=63 // pred_check_branch
          %1599 = sbr.rel (%p1597) target = $region104
        $region103: #{tpu_custom_call.1} parent=63 // pred_region
          %1601 = vsyncadd %s1578, 0
          %s1602 = smul.addr %s42, 4
          %s1603 = sadd.s32 %s43, %s1602
          %s1604 = smul.addr %s1603, 8
          %s1605 = scalar_lea.hbm %s12, %s1604
          %s1606 = sshll.u32 %s1581, 4
          %s1607 = int_to_ptr.vmem [resolvable:$true] %s1606
          %s1608 = sshll.u32 %s1605, 4
          %s1609 = int_to_ptr.hbm [resolvable:$true] %s1608
          %1614 = dma.vmem_to_hbm [thread:$0]  %s1607, 512, %s1609, %s1578, 128, 128, 8
        $region104: #{tpu_custom_call.1} parent=63 // pred_fallthru
          _
      $region64: #{tpu_custom_call.1} parent=5 // pred_fallthru
        _
      %p1615 = scmp.le.s32.totalorder 2, %s33
      // Predicated region
      $region105: #{tpu_custom_call.1} parent=5 // pred_check
        %p1616 = pneg %p1615
      $region106: #{tpu_custom_call.1} parent=5 // pred_check_branch
        %1618 = sbr.rel (%p1616) target = $region108
      $region107: #{tpu_custom_call.1} parent=5 // pred_region
        %s1619 = ssub.s32 %s33, 2
        // Predicated region
        $region109: #{tpu_custom_call.1} parent=107 // pred_check
          %p1620 = pneg %p324
        $region110: #{tpu_custom_call.1} parent=107 // pred_check_branch
          %1622 = sbr.rel (%p1620) target = $region112
        $region111: #{tpu_custom_call.1} parent=107 // pred_region
          %s1623 = sand.u32 %s309, 1
          %s1624 = scalar_lea.sflag [#allocation6], %s1623
          %s1625 = sand.u32 %s309, 1
          %s1626 = smul.addr %s1625, 8
          %s1627 = scalar_lea.vmem [#allocation16], %s1626
          %1629 = dma.done %s1624, 128
        $region112: #{tpu_custom_call.1} parent=107 // pred_fallthru
          _
        // Predicated region
        $region113: #{tpu_custom_call.1} parent=107 // pred_check
          %p1630 = pneg %p352
        $region114: #{tpu_custom_call.1} parent=107 // pred_check_branch
          %1632 = sbr.rel (%p1630) target = $region116
        $region115: #{tpu_custom_call.1} parent=107 // pred_region
          %s1633 = sand.u32 %s337, 1
          %s1634 = scalar_lea.sflag [#allocation18], %s1633
          %s1635 = sand.u32 %s337, 1
          %s1636 = smul.addr %s1635, 32
          %s1637 = scalar_lea.vmem [#allocation17], %s1636
          %1639 = dma.done %s1634, 512
        $region116: #{tpu_custom_call.1} parent=107 // pred_fallthru
          _
      $region108: #{tpu_custom_call.1} parent=5 // pred_fallthru
        _
    $region6: #{tpu_custom_call.1} parent=1 // loop_footer
      %s37 = sadd.s32 1, %s33
    $region7: #{tpu_custom_call.1} parent=1 // loop_footer_branch
      %32 = sbr.rel target = $region3
    $region8: #{tpu_custom_call.1} parent=1 // loop_exit
      _
    %1640 = vsyncpa [#allocation5], 1
    %s1641 = scalar_lea.sflag [#allocation5], 1
    %1642 = vsyncpa %s1641, 1
    %1643 = vsyncpa [#allocation8], 1
    %s1644 = scalar_lea.sflag [#allocation8], 1
    %1645 = vsyncpa %s1644, 1
    %1646 = vsyncpa [#allocation11], 1
    %1647 = vsyncpa [#allocation14], 1
    %1648 = vsyncpa [#allocation6], 1
    %s1649 = scalar_lea.sflag [#allocation6], 1
    %1650 = vsyncpa %s1649, 1
    %1651 = vsyncpa [#allocation18], 1
    %s1652 = scalar_lea.sflag [#allocation18], 1
    %1653 = vsyncpa %s1652, 1

</llo_original>
